<compile_context>
chip_gen: v7x
topology: tpu7x:2x2x1
jax: 0.10.0
libtpu: 0.0.40
codegen_flags: <defaults>
</compile_context>

<pallas_src>
import numpy as np
import jax
import jax.numpy as jnp
from jax import lax
from jax.experimental import pallas as pl
from jax.experimental.pallas import tpu as pltpu


def _round_up(a, b):
    return (a + b - 1) // b * b


def _ceil_div(a, b):
    return -(-a // b)


def _compute_pad(k, s, dim_size):
    """Mirror of Unit3D.compute_pad."""
    if dim_size % s == 0:
        return max(k - s, 0)
    return max(k - dim_size % s, 0)


# ----------------------------------------------------------------------------
# Pallas kernels
# ----------------------------------------------------------------------------

def _conv_stats_kernel(p_ref, w_ref, y_ref, stats_ref):
    """One (row-tile, K-tile) step of the im2col GEMM + BN statistics.

    p_ref:     (TR, TK)     bf16 patch tile
    w_ref:     (TK, Cp)     bf16 weight tile (Cp = Cout padded to 128)
    y_ref:     (TR, Cp)     f32 conv output; VMEM-resident across the K axis
                            and used directly as the accumulator.
    stats_ref: (1, 8, Cp)   per-row-tile partial BN stats
                            (row 0 = sum, row 1 = sum of squares).
    """
    k = pl.program_id(1)

    @pl.when(k == 0)
    def _():
        y_ref[...] = jnp.zeros_like(y_ref)

    # bf16 x bf16 -> f32 accumulation on the MXU.
    y_ref[...] += jnp.dot(p_ref[...], w_ref[...],
                          preferred_element_type=jnp.float32)

    @pl.when(k == pl.num_programs(1) - 1)
    def _():
        y = y_ref[...]
        s = jnp.sum(y, axis=0, keepdims=True)        # (1, Cp)
        ss = jnp.sum(y * y, axis=0, keepdims=True)   # (1, Cp)
        filler = jnp.zeros((6, s.shape[1]), jnp.float32)
        stats_ref[...] = jnp.concatenate([s, ss, filler], axis=0)[None]


def _bn_relu_kernel(y_ref, scale_ref, bias_ref, o_ref):
    """Pass 2: fused BN affine (scale/bias already folded) + ReLU."""
    o_ref[...] = jnp.maximum(y_ref[...] * scale_ref[...] + bias_ref[...], 0.0)


# ----------------------------------------------------------------------------
# Wrapper
# ----------------------------------------------------------------------------

def unit3d_forward(x, conv_w, gamma, beta,
                   kernel_shape=(3, 3, 3), stride=(1, 1, 1), eps=1e-3):
    """x: (N, Cin, T, H, W) f32 (PyTorch NCTHW). Returns (N, Cout, OT, OH, OW) f32."""
    N, Cin, T, H, W = x.shape
    Cout = conv_w.shape[0]
    KT, KH, KW = kernel_shape
    ST, SH, SW = stride

    OT, OH, OW = _ceil_div(T, ST), _ceil_div(H, SH), _ceil_div(W, SW)

    pad_t = _compute_pad(KT, ST, T)
    pad_h = _compute_pad(KH, SH, H)
    pad_w = _compute_pad(KW, SW, W)

    # SAME pad + channels-last (XLA glue).
    x_cl = jnp.transpose(x, (0, 2, 3, 4, 1))
    x_cl = jnp.pad(x_cl, ((0, 0),
                          (pad_t // 2, pad_t - pad_t // 2),
                          (pad_h // 2, pad_h - pad_h // 2),
                          (pad_w // 2, pad_w - pad_w // 2),
                          (0, 0)))

    R = N * OT * OH * OW
    K = KT * KH * KW * Cin

    # --- im2col patch matrix (R, K), bf16.  1x1x1/stride-1 is a pure reshape.
    x_bf = x_cl.astype(jnp.bfloat16)
    if (KT, KH, KW) == (1, 1, 1) and (ST, SH, SW) == (1, 1, 1):
        patches = x_bf.reshape(R, Cin)
    else:
        taps = []
        for kt in range(KT):
            for kh in range(KH):
                for kw in range(KW):
                    sl = lax.slice(
                        x_bf,
                        (0, kt, kh, kw, 0),
                        (N,
                         kt + (OT - 1) * ST + 1,
                         kh + (OH - 1) * SH + 1,
                         kw + (OW - 1) * SW + 1,
                         Cin),
                        strides=(1, ST, SH, SW, 1))
                    taps.append(sl.reshape(R, Cin))
        patches = jnp.concatenate(taps, axis=1)      # (R, K), tap-major

    # Weights (Cout, Cin, KT, KH, KW) -> (K, Cout), same tap-major order.
    # (In a real network this relayout is done once at parameter-load time.)
    w2d = jnp.transpose(conv_w, (2, 3, 4, 1, 0)).reshape(K, Cout)

    # --- Tiling choices.
    Cp = _round_up(max(Cout, 1), 128)        # lane-dense output channels
    if K <= 2048:                            # single full-K block
        tk, k_pad = K, K
    else:                                    # K-tiled accumulation
        tk = 512
        k_pad = _round_up(K, tk)

    row_tile = min(512, _round_up(R, 8))
    r_pad = _round_up(R, row_tile)

    patches = jnp.pad(patches, ((0, r_pad - R), (0, k_pad - K)))
    w_p = jnp.pad(w2d, ((0, k_pad - K), (0, Cp - Cout))).astype(jnp.bfloat16)

    n_row = r_pad // row_tile
    n_k = k_pad // tk

    # --- Pass 1: tiled GEMM + per-tile BN sum / sumsq.
    y, stats = pl.pallas_call(
        _conv_stats_kernel,
        grid=(n_row, n_k),
        in_specs=[
            pl.BlockSpec((row_tile, tk), lambda i, k: (i, k)),
            pl.BlockSpec((tk, Cp), lambda i, k: (k, 0)),
        ],
        out_specs=[
            pl.BlockSpec((row_tile, Cp), lambda i, k: (i, 0)),
            pl.BlockSpec((1, 8, Cp), lambda i, k: (i, 0, 0)),
        ],
        out_shape=[
            jax.ShapeDtypeStruct((r_pad, Cp), jnp.float32),
            jax.ShapeDtypeStruct((n_row, 8, Cp), jnp.float32),
        ],
        compiler_params=pltpu.CompilerParams(
            dimension_semantics=("parallel", "arbitrary"),
            vmem_limit_bytes=32 * 1024 * 1024),
    )(patches, w_p)

    # --- Fold BN statistics (tiny, O(Cout)) and fuse gamma/beta.
    sum_c = jnp.sum(stats[:, 0, :], axis=0)                # (Cp,)
    sq_c = jnp.sum(stats[:, 1, :], axis=0)                 # (Cp,)
    mean = sum_c / R                                       # zero-padded rows add 0
    var = jnp.maximum(sq_c / R - mean * mean, 0.0)
    gamma_p = jnp.pad(gamma.astype(jnp.float32), (0, Cp - Cout))
    beta_p = jnp.pad(beta.astype(jnp.float32), (0, Cp - Cout))
    scale = gamma_p * lax.rsqrt(var + eps)
    bias = beta_p - mean * scale

    # --- Pass 2: tiled (scale, bias, ReLU) epilogue.
    out_flat = pl.pallas_call(
        _bn_relu_kernel,
        grid=(n_row,),
        in_specs=[
            pl.BlockSpec((row_tile, Cp), lambda i: (i, 0)),
            pl.BlockSpec((1, Cp), lambda i: (0, 0)),
            pl.BlockSpec((1, Cp), lambda i: (0, 0)),
        ],
        out_specs=pl.BlockSpec((row_tile, Cp), lambda i: (i, 0)),
        out_shape=jax.ShapeDtypeStruct((r_pad, Cp), jnp.float32),
        compiler_params=pltpu.CompilerParams(
            dimension_semantics=("parallel",),
            vmem_limit_bytes=32 * 1024 * 1024),
    )(y, scale.reshape(1, Cp), bias.reshape(1, Cp))

    out = out_flat[:R, :Cout].reshape(N, OT, OH, OW, Cout)
    return jnp.transpose(out, (0, 4, 1, 2, 3))              # back to NCTHW


# ----------------------------------------------------------------------------
# Pure-JAX reference (same math, XLA conv) for validation.
# Inputs are rounded to bf16 to match the kernel's matmul precision; the
# accumulation itself is f32 in both.
# ----------------------------------------------------------------------------

def _reference(x, conv_w, gamma, beta, kernel_shape, stride, eps=1e-3):
    xb = x.astype(jnp.bfloat16).astype(jnp.float32)
    wb = conv_w.astype(jnp.bfloat16).astype(jnp.float32)
    KT, KH, KW = kernel_shape
    N, Cin, T, H, W = x.shape
    ST, SH, SW = stride
    pad_t = _compute_pad(KT, ST, T)
    pad_h = _compute_pad(KH, SH, H)
    pad_w = _compute_pad(KW, SW, W)
    x_pad = jnp.pad(xb, ((0, 0), (0, 0),
                         (pad_t // 2, pad_t - pad_t // 2),
                         (pad_h // 2, pad_h - pad_h // 2),
                         (pad_w // 2, pad_w - pad_w // 2)))
    y = lax.conv_general_dilated(
        x_pad, wb, window_strides=stride, padding='VALID',
        dimension_numbers=('NCDHW', 'OIDHW', 'NCDHW'),
        precision=lax.Precision.HIGHEST)
    mean = jnp.mean(y, axis=(0, 2, 3, 4), keepdims=True)
    var = jnp.mean((y - mean) ** 2, axis=(0, 2, 3, 4), keepdims=True)
    y = (y - mean) * lax.rsqrt(var + eps)
    y = y * gamma.reshape(1, -1, 1, 1, 1) + beta.reshape(1, -1, 1, 1, 1)
    return jnp.maximum(y, 0.0)


def _run_case(key, N, Cin, Cout, T, H, W, kernel_shape, stride):
    k_x, k_w, k_g, k_b = jax.random.split(key, 4)
    x = jax.random.normal(k_x, (N, Cin, T, H, W), dtype=jnp.float32)
    fan_in = Cin * int(np.prod(kernel_shape))
    conv_w = jax.random.normal(k_w, (Cout, Cin) + tuple(kernel_shape),
                               dtype=jnp.float32) * (1.0 / np.sqrt(fan_in))
    gamma = 1.0 + 0.1 * jax.random.normal(k_g, (Cout,), dtype=jnp.float32)
    beta = 0.1 * jax.random.normal(k_b, (Cout,), dtype=jnp.float32)

    out = jax.block_until_ready(
        unit3d_forward(x, conv_w, gamma, beta,
                       kernel_shape=kernel_shape, stride=stride))
    ref = jax.block_until_ready(
        _reference(x, conv_w, gamma, beta, kernel_shape, stride))

    ST, SH, SW = stride
    expected = (N, Cout, _ceil_div(T, ST), _ceil_div(H, SH), _ceil_div(W, SW))
    assert out.shape == expected, (out.shape, expected)
    np.testing.assert_allclose(np.asarray(out), np.asarray(ref),
                               rtol=2e-3, atol=2e-3)


if __name__ == "__main__":
    keys = jax.random.split(jax.random.PRNGKey(0), 4)
    # (a) 3x3x3 stride-1 Unit3D (Inception 3x3 branch shape).
    _run_case(keys[0], N=2, Cin=4, Cout=8, T=8, H=16, W=16,
              kernel_shape=(3, 3, 3), stride=(1, 1, 1))
    # (b) 1x1x1 Unit3D (the majority of Inception branches) -> pure GEMM path.
    _run_case(keys[1], N=2, Cin=32, Cout=16, T=8, H=16, W=16,
              kernel_shape=(1, 1, 1), stride=(1, 1, 1))
    # (c) stem-like 7x7x7 stride-2 Unit3D (Conv3d_1a_7x7 shape, small spatial).
    _run_case(keys[2], N=1, Cin=3, Cout=8, T=8, H=16, W=16,
              kernel_shape=(7, 7, 7), stride=(2, 2, 2))
    # (d) larger Cin so K = 27*128 > 2048, exercising the K-tiled accumulation.
    _run_case(keys[3], N=1, Cin=128, Cout=32, T=4, H=8, W=8,
              kernel_shape=(3, 3, 3), stride=(1, 1, 1))
    print("KERNEL_OK")
</pallas_src>

<mosaic_0001>
module attributes {stable_mosaic.version = 11 : i64} {
  func.func @_conv_stats_kernel(%arg0: i32, %arg1: i32, %arg2: memref<512x108xbf16, #tpu.memory_space<vmem>>, %arg3: memref<108x128xbf16, #tpu.memory_space<vmem>>, %arg4: memref<512x128xf32, #tpu.memory_space<vmem>>, %arg5: memref<1x8x128xf32, #tpu.memory_space<vmem>>) attributes {dimension_semantics = [#tpu.dimension_semantics<parallel>, #tpu.dimension_semantics<arbitrary>], iteration_bounds = array<i64: 8, 1>, scalar_prefetch = 0 : i64, scratch_operands = 0 : i64, tpu.core_type = #tpu.core_type<tc>, window_params = [{transform_indices = @transform_0, window_bounds = array<i64: 512, 108>}, {transform_indices = @transform_1, window_bounds = array<i64: 108, 128>}, {transform_indices = @transform_2, window_bounds = array<i64: 512, 128>}, {transform_indices = @transform_3, window_bounds = array<i64: 1, 8, 128>}]} {
    %c0_i32 = arith.constant 0 : i32
    %0 = arith.cmpi eq, %arg1, %c0_i32 : i32
    %1 = arith.extui %0 : i1 to i32
    %c0_i32_0 = arith.constant 0 : i32
    %2 = arith.cmpi ne, %1, %c0_i32_0 : i32
    scf.if %2 {
      %cst_10 = arith.constant 0.000000e+00 : f32
      %12 = vector.broadcast %cst_10 : f32 to vector<512x128xf32>
      %c0_11 = arith.constant 0 : index
      %c0_12 = arith.constant 0 : index
      %13 = vector.load %arg4[%c0_11, %c0_12] : memref<512x128xf32, #tpu.memory_space<vmem>>, vector<512x128xf32>
      tpu.vector_store %arg4[%c0_11, %c0_12], %12 {strides = array<i32>} : memref<512x128xf32, #tpu.memory_space<vmem>>, vector<512x128xf32>,
    } else {
    }
    %c0 = arith.constant 0 : index
    %c0_1 = arith.constant 0 : index
    %3 = vector.load %arg4[%c0, %c0_1] : memref<512x128xf32, #tpu.memory_space<vmem>>, vector<512x128xf32>
    %c0_2 = arith.constant 0 : index
    %c0_3 = arith.constant 0 : index
    %4 = vector.load %arg2[%c0_2, %c0_3] : memref<512x108xbf16, #tpu.memory_space<vmem>>, vector<512x108xbf16>
    %c0_4 = arith.constant 0 : index
    %c0_5 = arith.constant 0 : index
    %5 = vector.load %arg3[%c0_4, %c0_5] : memref<108x128xbf16, #tpu.memory_space<vmem>>, vector<108x128xbf16>
    %cst = arith.constant dense<0.000000e+00> : vector<512x128xf32>
    %6 = tpu.matmul %4, %5, %cst {dimension_numbers = #tpu.dot_dimension_numbers<[1], [0], [0], [1], [0, 0, 1, 1], [], []>} : vector<512x108xbf16>, vector<108x128xbf16>, vector<512x128xf32> -> vector<512x128xf32>
    %7 = arith.addf %3, %6 : vector<512x128xf32>
    %c0_6 = arith.constant 0 : index
    %c0_7 = arith.constant 0 : index
    %8 = vector.load %arg4[%c0_6, %c0_7] : memref<512x128xf32, #tpu.memory_space<vmem>>, vector<512x128xf32>
    tpu.vector_store %arg4[%c0_6, %c0_7], %7 {strides = array<i32>} : memref<512x128xf32, #tpu.memory_space<vmem>>, vector<512x128xf32>,
    %c0_i32_8 = arith.constant 0 : i32
    %9 = arith.cmpi eq, %arg1, %c0_i32_8 : i32
    %10 = arith.extui %9 : i1 to i32
    %c0_i32_9 = arith.constant 0 : i32
    %11 = arith.cmpi ne, %10, %c0_i32_9 : i32
    scf.if %11 {
      %c0_10 = arith.constant 0 : index
      %c0_11 = arith.constant 0 : index
      %12 = vector.load %arg4[%c0_10, %c0_11] : memref<512x128xf32, #tpu.memory_space<vmem>>, vector<512x128xf32>
      %cst_12 = arith.constant dense<0.000000e+00> : vector<128xf32>
      %13 = vector.multi_reduction <add>, %12, %cst_12 [0] : vector<512x128xf32> to vector<128xf32>
      %14 = vector.shape_cast %13 : vector<128xf32> to vector<1x128xf32>
      %15 = arith.mulf %12, %12 : vector<512x128xf32>
      %cst_13 = arith.constant dense<0.000000e+00> : vector<128xf32>
      %16 = vector.multi_reduction <add>, %15, %cst_13 [0] : vector<512x128xf32> to vector<128xf32>
      %17 = vector.shape_cast %16 : vector<128xf32> to vector<1x128xf32>
      %cst_14 = arith.constant 0.000000e+00 : f32
      %18 = vector.broadcast %cst_14 : f32 to vector<6x128xf32>
      %19 = tpu.concatenate %14, %17, %18 in 0 : vector<1x128xf32>, vector<1x128xf32>, vector<6x128xf32> -> vector<8x128xf32>
      %20 = vector.shape_cast %19 : vector<8x128xf32> to vector<1x8x128xf32>
      %c0_15 = arith.constant 0 : index
      %c0_16 = arith.constant 0 : index
      %c0_17 = arith.constant 0 : index
      %21 = vector.load %arg5[%c0_15, %c0_16, %c0_17] : memref<1x8x128xf32, #tpu.memory_space<vmem>>, vector<1x8x128xf32>
      tpu.vector_store %arg5[%c0_15, %c0_16, %c0_17], %20 {strides = array<i32>} : memref<1x8x128xf32, #tpu.memory_space<vmem>>, vector<1x8x128xf32>,
    } else {
    }
    return
  }
  func.func @transform_0(%arg0: i32, %arg1: i32) -> (i32, i32) {
    %c0_i32 = arith.constant 0 : i32
    return %arg0, %arg1 : i32, i32
  }
  func.func @transform_1(%arg0: i32, %arg1: i32) -> (i32, i32) {
    %c0_i32 = arith.constant 0 : i32
    %c0_i32_0 = arith.constant 0 : i32
    return %arg1, %c0_i32 : i32, i32
  }
  func.func @transform_2(%arg0: i32, %arg1: i32) -> (i32, i32) {
    %c0_i32 = arith.constant 0 : i32
    %c0_i32_0 = arith.constant 0 : i32
    return %arg0, %c0_i32 : i32, i32
  }
  func.func @transform_3(%arg0: i32, %arg1: i32) -> (i32, i32, i32) {
    %c0_i32 = arith.constant 0 : i32
    %c0_i32_0 = arith.constant 0 : i32
    %c0_i32_1 = arith.constant 0 : i32
    return %arg0, %c0_i32, %c0_i32_0 : i32, i32, i32
  }
}

</mosaic_0001>

<llo_original>
// kernel: tpu_custom_call.1
$region0: #{tpu_custom_call.1}
  #allocation0 [shape = 'u32[]', space=smem, size = 0x4, offset = 0x4, fixed_abs, tag = 'smem constant byte address 0x4 - core index']
  #allocation1 [shape = 'u32[144,128]{1,0:T(1,128)}', space=vmem, size = 0x12000, scoped, tag = 'internal scratch']
  %s0 = inlined_call_operand.vmem [shape: bf16[4096,108], index: 0, kind: input, shape index: {}]
  %s1 = inlined_call_operand.hbm [shape: bf16[108,128], index: 1, kind: input, shape index: {}]
  %s2 = inlined_call_operand.hbm [shape: f32[4096,128], index: 2, kind: output, shape index: {0}]
  %s3 = inlined_call_operand.hbm [shape: f32[8,8,128], index: 3, kind: output, shape index: {1}]
  %4 = xla_tuple %s2, %s3
  %s5 = sld [smem:[#allocation0]]
  $region61: #{tpu_custom_call.1} parent=0
    _
  %s7 = ssub.s32 1, %s5
  %s8 = scalar_select 0, %s7, %s5
  $region1: #{tpu_custom_call.1} parent=0
    #allocation2 [shape = 'u8[28672]{0}', space=vmem, size = 0x7000, scoped, tag = 'input window, operand 1, single buffered']
    #allocation3 [shape = 's32[2]{0}', space=sflag, size = 0x8, scoped, tag = 'scoped memory for tpu_custom_call.1']
    #allocation4 [shape = 's32[2]{0}', space=sflag, size = 0x8, scoped, tag = 'scoped memory for tpu_custom_call.1']
    #allocation5 [shape = 'u8[524288]{0}', space=vmem, size = 0x80000, scoped, tag = 'output window, operand 0']
    #allocation6 [shape = 'u8[8192]{0}', space=vmem, size = 0x2000, scoped, tag = 'output window, operand 1']
    #allocation7 [shape = 's32[2]{0}', space=sflag, size = 0x8, scoped, tag = 'scoped memory for tpu_custom_call.1']
    %9 = vsyncpa [#allocation3], 0
    %10 = vsyncpa [#allocation4], 0
    %s11 = scalar_lea.sflag [#allocation4], 1
    %12 = vsyncpa %s11, 0
    %13 = vsyncpa [#allocation7], 0
    %s14 = scalar_lea.sflag [#allocation7], 1
    %15 = vsyncpa %s14, 0
    loop: start=0, step=1, limit=10
    $region2: #{tpu_custom_call.1} parent=1 // loop_pre_header
      _
    $region3: #{tpu_custom_call.1} parent=1 // loop_header
      %s17 = sphi 0, %s21
      %p18 = scmp.ge.s32.totalorder %s17, 10
      %s24 = sphi 0, %s36
      %s25 = sphi 0, %s32
      %s26 = sphi 0, %s24
      %s27 = sphi 0, %s25
      %s28 = sphi 0, %s26
      %s29 = sphi 0, %s27
      %s41 = sphi 0, %s43
      %s44 = sphi 0, %s41
      %s45 = sphi 0, %s44
      %s61 = sphi 0, %s45
      %s67 = sphi 0, %s69
      %s70 = sphi 0, %s67
      %s71 = sphi 0, %s70
      %s87 = sphi 0, %s71
      %s93 = sphi 0, %s95
      %s96 = sphi 0, %s93
      %s97 = sphi 0, %s96
      %s113 = sphi 0, %s97
      %s119 = sphi 0, %s121
      %s122 = sphi 0, %s119
      %s123 = sphi 0, %s122
      %s139 = sphi 0, %s123
    $region4: #{tpu_custom_call.1} parent=1 // loop_header_branch
      %20 = sbr.rel (%p18) target = $region8
    $region5: #{tpu_custom_call.1} parent=1 // loop_body
      %s22 = ssub.s32 %s17, 1
      %s23 = ssub.s32 %s17, 2
      %s30 = sadd.s32 1, %s25
      %p31 = scmp.ge.s32.totalorder %s30, 1
      %s32 = scalar_select %p31, 0, %s30
      %s33 = sadd.s32 1, %s24
      %s34 = scalar_select %p31, %s33, %s24
      %p35 = scmp.ge.s32.totalorder %s34, 8
      %s36 = scalar_select %p35, 0, %s34
      %s37 = ssub.s32 %s24, %s36
      %s38 = ssub.s32 %s25, %s32
      %s39 = sor.u32 %s37, %s38
      %p40 = scmp.eq.s32.totalorder %s39, 0
      %s42 = sadd.s32 %s41, 1
      %s43 = scalar_select %p40, %s41, %s42
      %p46 = pneg %p40
      %p47 = scmp.eq.s32.totalorder %s17, 7
      %p48 = por %p46, %p47
      %p49 = scmp.ne.s32.totalorder %s41, %s44
      %p50 = scmp.eq.s32.totalorder %s17, 0
      %p51 = por %p49, %p50
      %p52 = scmp.ne.s32.totalorder %s41, %s44
      %p53 = scmp.eq.s32.totalorder %s22, 7
      %p54 = por %p52, %p53
      %p55 = scmp.ne.s32.totalorder %s44, %s45
      %p56 = scmp.eq.s32.totalorder %s22, 0
      %p57 = por %p55, %p56
      %p58 = scmp.ne.s32.totalorder %s44, %s45
      %p59 = scmp.eq.s32.totalorder %s23, 7
      %p60 = por %p58, %p59
      %p62 = scmp.ne.s32.totalorder %s45, %s61
      %p63 = scmp.eq.s32.totalorder %s23, 0
      %p64 = por %p62, %p63
      %s65 = ssub.s32 %s25, %s32
      %p66 = scmp.eq.s32.totalorder %s65, 0
      %s68 = sadd.s32 %s67, 1
      %s69 = scalar_select %p66, %s67, %s68
      %p72 = pneg %p66
      %p73 = scmp.eq.s32.totalorder %s17, 7
      %p74 = por %p72, %p73
      %p75 = scmp.ne.s32.totalorder %s67, %s70
      %p76 = scmp.eq.s32.totalorder %s17, 0
      %p77 = por %p75, %p76
      %p78 = scmp.ne.s32.totalorder %s67, %s70
      %p79 = scmp.eq.s32.totalorder %s22, 7
      %p80 = por %p78, %p79
      %p81 = scmp.ne.s32.totalorder %s70, %s71
      %p82 = scmp.eq.s32.totalorder %s22, 0
      %p83 = por %p81, %p82
      %p84 = scmp.ne.s32.totalorder %s70, %s71
      %p85 = scmp.eq.s32.totalorder %s23, 7
      %p86 = por %p84, %p85
      %p88 = scmp.ne.s32.totalorder %s71, %s87
      %p89 = scmp.eq.s32.totalorder %s23, 0
      %p90 = por %p88, %p89
      %s91 = ssub.s32 %s24, %s36
      %p92 = scmp.eq.s32.totalorder %s91, 0
      %s94 = sadd.s32 %s93, 1
      %s95 = scalar_select %p92, %s93, %s94
      %p98 = pneg %p92
      %p99 = scmp.eq.s32.totalorder %s17, 7
      %p100 = por %p98, %p99
      %p101 = scmp.ne.s32.totalorder %s93, %s96
      %p102 = scmp.eq.s32.totalorder %s17, 0
      %p103 = por %p101, %p102
      %p104 = scmp.ne.s32.totalorder %s93, %s96
      %p105 = scmp.eq.s32.totalorder %s22, 7
      %p106 = por %p104, %p105
      %p107 = scmp.ne.s32.totalorder %s96, %s97
      %p108 = scmp.eq.s32.totalorder %s22, 0
      %p109 = por %p107, %p108
      %p110 = scmp.ne.s32.totalorder %s96, %s97
      %p111 = scmp.eq.s32.totalorder %s23, 7
      %p112 = por %p110, %p111
      %p114 = scmp.ne.s32.totalorder %s97, %s113
      %p115 = scmp.eq.s32.totalorder %s23, 0
      %p116 = por %p114, %p115
      %s117 = ssub.s32 %s24, %s36
      %p118 = scmp.eq.s32.totalorder %s117, 0
      %s120 = sadd.s32 %s119, 1
      %s121 = scalar_select %p118, %s119, %s120
      %p124 = pneg %p118
      %p125 = scmp.eq.s32.totalorder %s17, 7
      %p126 = por %p124, %p125
      %p127 = scmp.ne.s32.totalorder %s119, %s122
      %p128 = scmp.eq.s32.totalorder %s17, 0
      %p129 = por %p127, %p128
      %p130 = scmp.ne.s32.totalorder %s119, %s122
      %p131 = scmp.eq.s32.totalorder %s22, 7
      %p132 = por %p130, %p131
      %p133 = scmp.ne.s32.totalorder %s122, %s123
      %p134 = scmp.eq.s32.totalorder %s22, 0
      %p135 = por %p133, %p134
      %p136 = scmp.ne.s32.totalorder %s122, %s123
      %p137 = scmp.eq.s32.totalorder %s23, 7
      %p138 = por %p136, %p137
      %p140 = scmp.ne.s32.totalorder %s123, %s139
      %p141 = scmp.eq.s32.totalorder %s23, 0
      %p142 = por %p140, %p141
      %p143 = scmp.le.s32.totalorder 1, %s17
      %p144 = scmp.lt.s32.totalorder %s17, 9
      %p145 = pnand %p143, %p144
      %p146 = pneg %p145
      // Predicated region
      $region9: #{tpu_custom_call.1} parent=5 // pred_check
        _
      $region10: #{tpu_custom_call.1} parent=5 // pred_check_branch
        %148 = sbr.rel (%p145) target = $region12
      $region11: #{tpu_custom_call.1} parent=5 // pred_region
        %s149 = ssub.s32 %s17, 1
        // Predicated region
        $region13: #{tpu_custom_call.1} parent=11 // pred_check
          %p150 = pneg %p83
        $region14: #{tpu_custom_call.1} parent=11 // pred_check_branch
          %152 = sbr.rel (%p150) target = $region16
        $region15: #{tpu_custom_call.1} parent=11 // pred_region
          %s153 = smul.u32 14, %s27
          %s155 = ssub.s32 896, 896
          %156 = vsyncadd [#allocation3], %s155
          %s157 = smul.addr %s153, 64
          %s158 = scalar_lea.hbm %s1, %s157
          %s159 = sshll.u32 [#allocation2], 4
          %s160 = int_to_ptr.vmem [resolvable:$true] %s159
          %165 = dma.hbm_to_vmem [thread:$0]  %s158, 896, %s160, [#allocation3], 64, 64, 4
        $region16: #{tpu_custom_call.1} parent=11 // pred_fallthru
          _
      $region12: #{tpu_custom_call.1} parent=5 // pred_fallthru
        _
      %p166 = scmp.lt.s32.totalorder %s17, 8
      // Predicated region
      $region17: #{tpu_custom_call.1} parent=5 // pred_check
        %p167 = pneg %p166
      $region18: #{tpu_custom_call.1} parent=5 // pred_check_branch
        %169 = sbr.rel (%p167) target = $region20
      $region19: #{tpu_custom_call.1} parent=5 // pred_region
        // Predicated region
        $region21: #{tpu_custom_call.1} parent=19 // pred_check
          %p170 = pneg %p51
        $region22: #{tpu_custom_call.1} parent=19 // pred_check_branch
          %172 = sbr.rel (%p170) target = $region24
        $region23: #{tpu_custom_call.1} parent=19 // pred_region
          %s173 = smul.u32 64, %s24
          %p174 = scmp.lt.s32.totalorder %s173, 511
          %s175 = scalar_select %p174, %s173, 511
          %p176 = scmp.lt.s32.totalorder %s25, 0
          %s177 = scalar_select %p176, %s25, 0
          %s178 = sadd.s32 %s177, %s175
          %s179 = smul.addr %s178, 4
          %s180 = scalar_lea.vmem %s0, %s179
          %s181 = smul.u32 64, %s24
        $region24: #{tpu_custom_call.1} parent=19 // pred_fallthru
          _
      $region20: #{tpu_custom_call.1} parent=5 // pred_fallthru
        _
      %p182 = scmp.le.s32.totalorder 1, %s17
      %p183 = scmp.lt.s32.totalorder %s17, 9
      %p184 = pnand %p182, %p183
      %p185 = pneg %p184
      // Predicated region
      $region25: #{tpu_custom_call.1} parent=5 // pred_check
        _
      $region26: #{tpu_custom_call.1} parent=5 // pred_check_branch
        %187 = sbr.rel (%p184) target = $region28
      $region27: #{tpu_custom_call.1} parent=5 // pred_region
        %s188 = ssub.s32 %s17, 1
        // Predicated region
        $region29: #{tpu_custom_call.1} parent=27 // pred_check
          %p189 = pneg %p83
        $region30: #{tpu_custom_call.1} parent=27 // pred_check_branch
          %191 = sbr.rel (%p189) target = $region32
        $region31: #{tpu_custom_call.1} parent=27 // pred_region
          %192 = dma.done [#allocation3], 896
        $region32: #{tpu_custom_call.1} parent=27 // pred_fallthru
          _
        %s193 = smul.u32 64, %s26
        %p194 = scmp.lt.s32.totalorder %s193, 511
        %s195 = scalar_select %p194, %s193, 511
        %p196 = scmp.lt.s32.totalorder %s27, 0
        %s197 = scalar_select %p196, %s27, 0
        %s198 = sadd.s32 %s197, %s195
        %s199 = smul.addr %s198, 4
        %s200 = scalar_lea.vmem %s0, %s199
        %p201 = pneg %p57
        %p202 = pneg %p54
        %p203 = pneg %p83
        %p204 = pneg %p80
        %p205 = pneg %p109
        %p206 = pneg %p106
        %s207 = sand.u32 %s96, 1
        %s208 = scalar_lea.sflag [#allocation4], %s207
        %s209 = sand.u32 %s96, 1
        %s210 = smul.addr %s209, 512
        %s211 = scalar_lea.vmem [#allocation5], %s210
        %p212 = pneg %p135
        %p213 = pneg %p132
        %s214 = sand.u32 %s122, 1
        %s215 = scalar_lea.sflag [#allocation7], %s214
        %s216 = sand.u32 %s122, 1
        %s217 = smul.addr %s216, 8
        %s218 = scalar_lea.vmem [#allocation6], %s217
        %s219 = smul.u32 64, %s26
        %p220 = scmp.lt.s32.totalorder %s219, 511
        %s221 = scalar_select %p220, %s219, 511
        %p222 = scmp.lt.s32.totalorder %s27, 0
        %s223 = scalar_select %p222, %s27, 0
        %s224 = sadd.s32 %s223, %s221
        %s225 = smul.addr %s224, 4
        %s226 = scalar_lea.vmem %s0, %s225
        %s227 = smul.u32 64, %s26
        %s228 = smul.u32 14, %s27
        %s229 = smul.u32 64, %s26
        %p231 = scmp.eq.s32.totalorder %s27, 0
        // Predicated region
        $region33: #{tpu_custom_call.1} parent=27 // pred_check
          %p232 = pneg %p231
        $region34: #{tpu_custom_call.1} parent=27 // pred_check_branch
          %234 = sbr.rel (%p232) target = $region36
        $region35: #{tpu_custom_call.1} parent=27 // pred_region
          %235 = vst [vmem:[%s211] sm:$0xff] 0.0
          %236 = vst [vmem:[%s211 + $0x8] sm:$0xff] 0.0
          %237 = vst [vmem:[%s211 + $0x10] sm:$0xff] 0.0
          %238 = vst [vmem:[%s211 + $0x18] sm:$0xff] 0.0
          %239 = vst [vmem:[%s211 + $0x20] sm:$0xff] 0.0
          %240 = vst [vmem:[%s211 + $0x28] sm:$0xff] 0.0
          %241 = vst [vmem:[%s211 + $0x30] sm:$0xff] 0.0
          %242 = vst [vmem:[%s211 + $0x38] sm:$0xff] 0.0
          %243 = vst [vmem:[%s211 + $0x40] sm:$0xff] 0.0
          %244 = vst [vmem:[%s211 + $0x48] sm:$0xff] 0.0
          %245 = vst [vmem:[%s211 + $0x50] sm:$0xff] 0.0
          %246 = vst [vmem:[%s211 + $0x58] sm:$0xff] 0.0
          %247 = vst [vmem:[%s211 + $0x60] sm:$0xff] 0.0
          %248 = vst [vmem:[%s211 + $0x68] sm:$0xff] 0.0
          %249 = vst [vmem:[%s211 + $0x70] sm:$0xff] 0.0
          %250 = vst [vmem:[%s211 + $0x78] sm:$0xff] 0.0
          %251 = vst [vmem:[%s211 + $0x80] sm:$0xff] 0.0
          %252 = vst [vmem:[%s211 + $0x88] sm:$0xff] 0.0
          %253 = vst [vmem:[%s211 + $0x90] sm:$0xff] 0.0
          %254 = vst [vmem:[%s211 + $0x98] sm:$0xff] 0.0
          %255 = vst [vmem:[%s211 + $0xa0] sm:$0xff] 0.0
          %256 = vst [vmem:[%s211 + $0xa8] sm:$0xff] 0.0
          %257 = vst [vmem:[%s211 + $0xb0] sm:$0xff] 0.0
          %258 = vst [vmem:[%s211 + $0xb8] sm:$0xff] 0.0
          %259 = vst [vmem:[%s211 + $0xc0] sm:$0xff] 0.0
          %260 = vst [vmem:[%s211 + $0xc8] sm:$0xff] 0.0
          %261 = vst [vmem:[%s211 + $0xd0] sm:$0xff] 0.0
          %262 = vst [vmem:[%s211 + $0xd8] sm:$0xff] 0.0
          %263 = vst [vmem:[%s211 + $0xe0] sm:$0xff] 0.0
          %264 = vst [vmem:[%s211 + $0xe8] sm:$0xff] 0.0
          %265 = vst [vmem:[%s211 + $0xf0] sm:$0xff] 0.0
          %266 = vst [vmem:[%s211 + $0xf8] sm:$0xff] 0.0
          %267 = vst [vmem:[%s211 + $0x100] sm:$0xff] 0.0
          %268 = vst [vmem:[%s211 + $0x108] sm:$0xff] 0.0
          %269 = vst [vmem:[%s211 + $0x110] sm:$0xff] 0.0
          %270 = vst [vmem:[%s211 + $0x118] sm:$0xff] 0.0
          %271 = vst [vmem:[%s211 + $0x120] sm:$0xff] 0.0
          %272 = vst [vmem:[%s211 + $0x128] sm:$0xff] 0.0
          %273 = vst [vmem:[%s211 + $0x130] sm:$0xff] 0.0
          %274 = vst [vmem:[%s211 + $0x138] sm:$0xff] 0.0
          %275 = vst [vmem:[%s211 + $0x140] sm:$0xff] 0.0
          %276 = vst [vmem:[%s211 + $0x148] sm:$0xff] 0.0
          %277 = vst [vmem:[%s211 + $0x150] sm:$0xff] 0.0
          %278 = vst [vmem:[%s211 + $0x158] sm:$0xff] 0.0
          %279 = vst [vmem:[%s211 + $0x160] sm:$0xff] 0.0
          %280 = vst [vmem:[%s211 + $0x168] sm:$0xff] 0.0
          %281 = vst [vmem:[%s211 + $0x170] sm:$0xff] 0.0
          %282 = vst [vmem:[%s211 + $0x178] sm:$0xff] 0.0
          %283 = vst [vmem:[%s211 + $0x180] sm:$0xff] 0.0
          %284 = vst [vmem:[%s211 + $0x188] sm:$0xff] 0.0
          %285 = vst [vmem:[%s211 + $0x190] sm:$0xff] 0.0
          %286 = vst [vmem:[%s211 + $0x198] sm:$0xff] 0.0
          %287 = vst [vmem:[%s211 + $0x1a0] sm:$0xff] 0.0
          %288 = vst [vmem:[%s211 + $0x1a8] sm:$0xff] 0.0
          %289 = vst [vmem:[%s211 + $0x1b0] sm:$0xff] 0.0
          %290 = vst [vmem:[%s211 + $0x1b8] sm:$0xff] 0.0
          %291 = vst [vmem:[%s211 + $0x1c0] sm:$0xff] 0.0
          %292 = vst [vmem:[%s211 + $0x1c8] sm:$0xff] 0.0
          %293 = vst [vmem:[%s211 + $0x1d0] sm:$0xff] 0.0
          %294 = vst [vmem:[%s211 + $0x1d8] sm:$0xff] 0.0
          %295 = vst [vmem:[%s211 + $0x1e0] sm:$0xff] 0.0
          %296 = vst [vmem:[%s211 + $0x1e8] sm:$0xff] 0.0
          %297 = vst [vmem:[%s211 + $0x1f0] sm:$0xff] 0.0
          %298 = vst [vmem:[%s211 + $0x1f8] sm:$0xff] 0.0
        $region36: #{tpu_custom_call.1} parent=27 // pred_fallthru
          _
        %v299 = vld [vmem:[%s211] sm:$0xff]
        %v300 = vld [vmem:[%s211 + $0x8] sm:$0xff]
        %v301 = vld [vmem:[%s211 + $0x10] sm:$0xff]
        %v302 = vld [vmem:[%s211 + $0x18] sm:$0xff]
        %v303 = vld [vmem:[%s211 + $0x20] sm:$0xff]
        %v304 = vld [vmem:[%s211 + $0x28] sm:$0xff]
        %v305 = vld [vmem:[%s211 + $0x30] sm:$0xff]
        %v306 = vld [vmem:[%s211 + $0x38] sm:$0xff]
        %v307 = vld [vmem:[%s211 + $0x40] sm:$0xff]
        %v308 = vld [vmem:[%s211 + $0x48] sm:$0xff]
        %v309 = vld [vmem:[%s211 + $0x50] sm:$0xff]
        %v310 = vld [vmem:[%s211 + $0x58] sm:$0xff]
        %v311 = vld [vmem:[%s211 + $0x60] sm:$0xff]
        %v312 = vld [vmem:[%s211 + $0x68] sm:$0xff]
        %v313 = vld [vmem:[%s211 + $0x70] sm:$0xff]
        %v314 = vld [vmem:[%s211 + $0x78] sm:$0xff]
        %v315 = vld [vmem:[%s211 + $0x80] sm:$0xff]
        %v316 = vld [vmem:[%s211 + $0x88] sm:$0xff]
        %v317 = vld [vmem:[%s211 + $0x90] sm:$0xff]
        %v318 = vld [vmem:[%s211 + $0x98] sm:$0xff]
        %v319 = vld [vmem:[%s211 + $0xa0] sm:$0xff]
        %v320 = vld [vmem:[%s211 + $0xa8] sm:$0xff]
        %v321 = vld [vmem:[%s211 + $0xb0] sm:$0xff]
        %v322 = vld [vmem:[%s211 + $0xb8] sm:$0xff]
        %v323 = vld [vmem:[%s211 + $0xc0] sm:$0xff]
        %v324 = vld [vmem:[%s211 + $0xc8] sm:$0xff]
        %v325 = vld [vmem:[%s211 + $0xd0] sm:$0xff]
        %v326 = vld [vmem:[%s211 + $0xd8] sm:$0xff]
        %v327 = vld [vmem:[%s211 + $0xe0] sm:$0xff]
        %v328 = vld [vmem:[%s211 + $0xe8] sm:$0xff]
        %v329 = vld [vmem:[%s211 + $0xf0] sm:$0xff]
        %v330 = vld [vmem:[%s211 + $0xf8] sm:$0xff]
        %v331 = vld [vmem:[%s211 + $0x100] sm:$0xff]
        %v332 = vld [vmem:[%s211 + $0x108] sm:$0xff]
        %v333 = vld [vmem:[%s211 + $0x110] sm:$0xff]
        %v334 = vld [vmem:[%s211 + $0x118] sm:$0xff]
        %v335 = vld [vmem:[%s211 + $0x120] sm:$0xff]
        %v336 = vld [vmem:[%s211 + $0x128] sm:$0xff]
        %v337 = vld [vmem:[%s211 + $0x130] sm:$0xff]
        %v338 = vld [vmem:[%s211 + $0x138] sm:$0xff]
        %v339 = vld [vmem:[%s211 + $0x140] sm:$0xff]
        %v340 = vld [vmem:[%s211 + $0x148] sm:$0xff]
        %v341 = vld [vmem:[%s211 + $0x150] sm:$0xff]
        %v342 = vld [vmem:[%s211 + $0x158] sm:$0xff]
        %v343 = vld [vmem:[%s211 + $0x160] sm:$0xff]
        %v344 = vld [vmem:[%s211 + $0x168] sm:$0xff]
        %v345 = vld [vmem:[%s211 + $0x170] sm:$0xff]
        %v346 = vld [vmem:[%s211 + $0x178] sm:$0xff]
        %v347 = vld [vmem:[%s211 + $0x180] sm:$0xff]
        %v348 = vld [vmem:[%s211 + $0x188] sm:$0xff]
        %v349 = vld [vmem:[%s211 + $0x190] sm:$0xff]
        %v350 = vld [vmem:[%s211 + $0x198] sm:$0xff]
        %v351 = vld [vmem:[%s211 + $0x1a0] sm:$0xff]
        %v352 = vld [vmem:[%s211 + $0x1a8] sm:$0xff]
        %v353 = vld [vmem:[%s211 + $0x1b0] sm:$0xff]
        %v354 = vld [vmem:[%s211 + $0x1b8] sm:$0xff]
        %v355 = vld [vmem:[%s211 + $0x1c0] sm:$0xff]
        %v356 = vld [vmem:[%s211 + $0x1c8] sm:$0xff]
        %v357 = vld [vmem:[%s211 + $0x1d0] sm:$0xff]
        %v358 = vld [vmem:[%s211 + $0x1d8] sm:$0xff]
        %v359 = vld [vmem:[%s211 + $0x1e0] sm:$0xff]
        %v360 = vld [vmem:[%s211 + $0x1e8] sm:$0xff]
        %v361 = vld [vmem:[%s211 + $0x1f0] sm:$0xff]
        %v362 = vld [vmem:[%s211 + $0x1f8] sm:$0xff]
        %v363 = vld [vmem:[%s226] sm:$0xf]
        %v364 = vld [vmem:[%s226 + $0x4] sm:$0xf]
        %v365 = vld [vmem:[%s226 + $0x8] sm:$0xf]
        %v366 = vld [vmem:[%s226 + $0xc] sm:$0xf]
        %v367 = vld [vmem:[%s226 + $0x10] sm:$0xf]
        %v368 = vld [vmem:[%s226 + $0x14] sm:$0xf]
        %v369 = vld [vmem:[%s226 + $0x18] sm:$0xf]
        %v370 = vld [vmem:[%s226 + $0x1c] sm:$0xf]
        %v371 = vld [vmem:[%s226 + $0x20] sm:$0xf]
        %v372 = vld [vmem:[%s226 + $0x24] sm:$0xf]
        %v373 = vld [vmem:[%s226 + $0x28] sm:$0xf]
        %v374 = vld [vmem:[%s226 + $0x2c] sm:$0xf]
        %v375 = vld [vmem:[%s226 + $0x30] sm:$0xf]
        %v376 = vld [vmem:[%s226 + $0x34] sm:$0xf]
        %v377 = vld [vmem:[%s226 + $0x38] sm:$0xf]
        %v378 = vld [vmem:[%s226 + $0x3c] sm:$0xf]
        %v379 = vld [vmem:[%s226 + $0x40] sm:$0xf]
        %v380 = vld [vmem:[%s226 + $0x44] sm:$0xf]
        %v381 = vld [vmem:[%s226 + $0x48] sm:$0xf]
        %v382 = vld [vmem:[%s226 + $0x4c] sm:$0xf]
        %v383 = vld [vmem:[%s226 + $0x50] sm:$0xf]
        %v384 = vld [vmem:[%s226 + $0x54] sm:$0xf]
        %v385 = vld [vmem:[%s226 + $0x58] sm:$0xf]
        %v386 = vld [vmem:[%s226 + $0x5c] sm:$0xf]
        %v387 = vld [vmem:[%s226 + $0x60] sm:$0xf]
        %v388 = vld [vmem:[%s226 + $0x64] sm:$0xf]
        %v389 = vld [vmem:[%s226 + $0x68] sm:$0xf]
        %v390 = vld [vmem:[%s226 + $0x6c] sm:$0xf]
        %v391 = vld [vmem:[%s226 + $0x70] sm:$0xf]
        %v392 = vld [vmem:[%s226 + $0x74] sm:$0xf]
        %v393 = vld [vmem:[%s226 + $0x78] sm:$0xf]
        %v394 = vld [vmem:[%s226 + $0x7c] sm:$0xf]
        %v395 = vld [vmem:[%s226 + $0x80] sm:$0xf]
        %v396 = vld [vmem:[%s226 + $0x84] sm:$0xf]
        %v397 = vld [vmem:[%s226 + $0x88] sm:$0xf]
        %v398 = vld [vmem:[%s226 + $0x8c] sm:$0xf]
        %v399 = vld [vmem:[%s226 + $0x90] sm:$0xf]
        %v400 = vld [vmem:[%s226 + $0x94] sm:$0xf]
        %v401 = vld [vmem:[%s226 + $0x98] sm:$0xf]
        %v402 = vld [vmem:[%s226 + $0x9c] sm:$0xf]
        %v403 = vld [vmem:[%s226 + $0xa0] sm:$0xf]
        %v404 = vld [vmem:[%s226 + $0xa4] sm:$0xf]
        %v405 = vld [vmem:[%s226 + $0xa8] sm:$0xf]
        %v406 = vld [vmem:[%s226 + $0xac] sm:$0xf]
        %v407 = vld [vmem:[%s226 + $0xb0] sm:$0xf]
        %v408 = vld [vmem:[%s226 + $0xb4] sm:$0xf]
        %v409 = vld [vmem:[%s226 + $0xb8] sm:$0xf]
        %v410 = vld [vmem:[%s226 + $0xbc] sm:$0xf]
        %v411 = vld [vmem:[%s226 + $0xc0] sm:$0xf]
        %v412 = vld [vmem:[%s226 + $0xc4] sm:$0xf]
        %v413 = vld [vmem:[%s226 + $0xc8] sm:$0xf]
        %v414 = vld [vmem:[%s226 + $0xcc] sm:$0xf]
        %v415 = vld [vmem:[%s226 + $0xd0] sm:$0xf]
        %v416 = vld [vmem:[%s226 + $0xd4] sm:$0xf]
        %v417 = vld [vmem:[%s226 + $0xd8] sm:$0xf]
        %v418 = vld [vmem:[%s226 + $0xdc] sm:$0xf]
        %v419 = vld [vmem:[%s226 + $0xe0] sm:$0xf]
        %v420 = vld [vmem:[%s226 + $0xe4] sm:$0xf]
        %v421 = vld [vmem:[%s226 + $0xe8] sm:$0xf]
        %v422 = vld [vmem:[%s226 + $0xec] sm:$0xf]
        %v423 = vld [vmem:[%s226 + $0xf0] sm:$0xf]
        %v424 = vld [vmem:[%s226 + $0xf4] sm:$0xf]
        %v425 = vld [vmem:[%s226 + $0xf8] sm:$0xf]
        %v426 = vld [vmem:[%s226 + $0xfc] sm:$0xf]
        %v427 = vld [vmem:[#allocation2] sm:$0xf]
        %v428 = vld [vmem:[#allocation2 + $0x4] sm:$0xf]
        %v429 = vld [vmem:[#allocation2 + $0x8] sm:$0xf]
        %v430 = vld [vmem:[#allocation2 + $0xc] sm:$0xf]
        %v431 = vld [vmem:[#allocation2 + $0x10] sm:$0xf]
        %v432 = vld [vmem:[#allocation2 + $0x14] sm:$0xf]
        %v433 = vld [vmem:[#allocation2 + $0x18] sm:$0xf]
        %v434 = vld [vmem:[#allocation2 + $0x1c] sm:$0xf]
        %v435 = vld [vmem:[#allocation2 + $0x20] sm:$0xf]
        %v436 = vld [vmem:[#allocation2 + $0x24] sm:$0xf]
        %v437 = vld [vmem:[#allocation2 + $0x28] sm:$0xf]
        %v438 = vld [vmem:[#allocation2 + $0x2c] sm:$0xf]
        %v439 = vld [vmem:[#allocation2 + $0x30] sm:$0xf]
        %v440 = vld [vmem:[#allocation2 + $0x34] sm:$0x3]
        %v505 = vunpack.c.l.b16 %v363
        %v506 = vunpack.c.l.b16 %v364
        %v507 = vunpack.c.l.b16 %v365
        %v508 = vunpack.c.l.b16 %v366
        %v509 = vunpack.c.l.b16 %v367
        %v510 = vunpack.c.l.b16 %v368
        %v511 = vunpack.c.l.b16 %v369
        %v512 = vunpack.c.l.b16 %v370
        %v513 = vunpack.c.l.b16 %v371
        %v514 = vunpack.c.l.b16 %v372
        %v515 = vunpack.c.l.b16 %v373
        %v516 = vunpack.c.l.b16 %v374
        %v517 = vunpack.c.l.b16 %v375
        %v518 = vunpack.c.l.b16 %v376
        %v519 = vunpack.c.l.b16 %v377
        %v520 = vunpack.c.l.b16 %v378
        %v521 = vunpack.c.l.b16 %v379
        %v522 = vunpack.c.l.b16 %v380
        %v523 = vunpack.c.l.b16 %v381
        %v524 = vunpack.c.l.b16 %v382
        %v525 = vunpack.c.l.b16 %v383
        %v526 = vunpack.c.l.b16 %v384
        %v527 = vunpack.c.l.b16 %v385
        %v528 = vunpack.c.l.b16 %v386
        %v529 = vunpack.c.l.b16 %v387
        %v530 = vunpack.c.l.b16 %v388
        %v531 = vunpack.c.l.b16 %v389
        %v532 = vunpack.c.l.b16 %v390
        %v533 = vunpack.c.l.b16 %v391
        %v534 = vunpack.c.l.b16 %v392
        %v535 = vunpack.c.l.b16 %v393
        %v536 = vunpack.c.l.b16 %v394
        %v537 = vunpack.c.l.b16 %v395
        %v538 = vunpack.c.l.b16 %v396
        %v539 = vunpack.c.l.b16 %v397
        %v540 = vunpack.c.l.b16 %v398
        %v541 = vunpack.c.l.b16 %v399
        %v542 = vunpack.c.l.b16 %v400
        %v543 = vunpack.c.l.b16 %v401
        %v544 = vunpack.c.l.b16 %v402
        %v545 = vunpack.c.l.b16 %v403
        %v546 = vunpack.c.l.b16 %v404
        %v547 = vunpack.c.l.b16 %v405
        %v548 = vunpack.c.l.b16 %v406
        %v549 = vunpack.c.l.b16 %v407
        %v550 = vunpack.c.l.b16 %v408
        %v551 = vunpack.c.l.b16 %v409
        %v552 = vunpack.c.l.b16 %v410
        %v553 = vunpack.c.l.b16 %v411
        %v554 = vunpack.c.l.b16 %v412
        %v555 = vunpack.c.l.b16 %v413
        %v556 = vunpack.c.l.b16 %v414
        %v557 = vunpack.c.l.b16 %v415
        %v558 = vunpack.c.l.b16 %v416
        %v559 = vunpack.c.l.b16 %v417
        %v560 = vunpack.c.l.b16 %v418
        %v561 = vunpack.c.l.b16 %v419
        %v562 = vunpack.c.l.b16 %v420
        %v563 = vunpack.c.l.b16 %v421
        %v564 = vunpack.c.l.b16 %v422
        %v565 = vunpack.c.l.b16 %v423
        %v566 = vunpack.c.l.b16 %v424
        %v567 = vunpack.c.l.b16 %v425
        %v568 = vunpack.c.l.b16 %v426
        %v569 = vpack.c.b16 %v506, %v505
        %v570 = vpack.c.b16 %v508, %v507
        %v571 = vpack.c.b16 %v510, %v509
        %v572 = vpack.c.b16 %v512, %v511
        %v573 = vpack.c.b16 %v514, %v513
        %v574 = vpack.c.b16 %v516, %v515
        %v575 = vpack.c.b16 %v518, %v517
        %v576 = vpack.c.b16 %v520, %v519
        %v577 = vpack.c.b16 %v522, %v521
        %v578 = vpack.c.b16 %v524, %v523
        %v579 = vpack.c.b16 %v526, %v525
        %v580 = vpack.c.b16 %v528, %v527
        %v581 = vpack.c.b16 %v530, %v529
        %v582 = vpack.c.b16 %v532, %v531
        %v583 = vpack.c.b16 %v534, %v533
        %v584 = vpack.c.b16 %v536, %v535
        %v585 = vpack.c.b16 %v538, %v537
        %v586 = vpack.c.b16 %v540, %v539
        %v587 = vpack.c.b16 %v542, %v541
        %v588 = vpack.c.b16 %v544, %v543
        %v589 = vpack.c.b16 %v546, %v545
        %v590 = vpack.c.b16 %v548, %v547
        %v591 = vpack.c.b16 %v550, %v549
        %v592 = vpack.c.b16 %v552, %v551
        %v593 = vpack.c.b16 %v554, %v553
        %v594 = vpack.c.b16 %v556, %v555
        %v595 = vpack.c.b16 %v558, %v557
        %v596 = vpack.c.b16 %v560, %v559
        %v597 = vpack.c.b16 %v562, %v561
        %v598 = vpack.c.b16 %v564, %v563
        %v599 = vpack.c.b16 %v566, %v565
        %v600 = vpack.c.b16 %v568, %v567
        %v615 = vunpack.c.l.b16 %v427
        %v616 = vunpack.c.l.b16 %v428
        %v617 = vunpack.c.l.b16 %v429
        %v618 = vunpack.c.l.b16 %v430
        %v619 = vunpack.c.l.b16 %v431
        %v620 = vunpack.c.l.b16 %v432
        %v621 = vunpack.c.l.b16 %v433
        %v622 = vunpack.c.l.b16 %v434
        %v623 = vunpack.c.l.b16 %v435
        %v624 = vunpack.c.l.b16 %v436
        %v625 = vunpack.c.l.b16 %v437
        %v626 = vunpack.c.l.b16 %v438
        %v627 = vunpack.c.l.b16 %v439
        %v628 = vunpack.c.l.b16 %v440
        %v629 = vpack.c.b16 %v616, %v615
        %v630 = vpack.c.b16 %v618, %v617
        %v631 = vpack.c.b16 %v620, %v619
        %v632 = vpack.c.b16 %v622, %v621
        %v633 = vpack.c.b16 %v624, %v623
        %v634 = vpack.c.b16 %v626, %v625
        %v635 = vpack.c.b16 %v628, %v627
        %vm642 = vcmask 883712
        %v644 = vsel %vm642, %v569, 0
        %v647 = vsel %vm642, %v570, 0
        %v650 = vsel %vm642, %v571, 0
        %v653 = vsel %vm642, %v572, 0
        %v656 = vsel %vm642, %v573, 0
        %v659 = vsel %vm642, %v574, 0
        %v662 = vsel %vm642, %v575, 0
        %v665 = vsel %vm642, %v576, 0
        %v668 = vsel %vm642, %v577, 0
        %v671 = vsel %vm642, %v578, 0
        %v674 = vsel %vm642, %v579, 0
        %v677 = vsel %vm642, %v580, 0
        %v680 = vsel %vm642, %v581, 0
        %v683 = vsel %vm642, %v582, 0
        %v686 = vsel %vm642, %v583, 0
        %v689 = vsel %vm642, %v584, 0
        %v692 = vsel %vm642, %v585, 0
        %v695 = vsel %vm642, %v586, 0
        %v698 = vsel %vm642, %v587, 0
        %v701 = vsel %vm642, %v588, 0
        %v704 = vsel %vm642, %v589, 0
        %v707 = vsel %vm642, %v590, 0
        %v710 = vsel %vm642, %v591, 0
        %v713 = vsel %vm642, %v592, 0
        %v716 = vsel %vm642, %v593, 0
        %v719 = vsel %vm642, %v594, 0
        %v722 = vsel %vm642, %v595, 0
        %v725 = vsel %vm642, %v596, 0
        %v728 = vsel %vm642, %v597, 0
        %v731 = vsel %vm642, %v598, 0
        %v734 = vsel %vm642, %v599, 0
        %v737 = vsel %vm642, %v600, 0
        %vm739 = vcmask 1045504
        %v741 = vsel %vm739, %v635, 0
        %743 = vmatprep.subr.bf16.mxu0 0
        %744 = vmatpush1.bf16.msra.mxu0 %v629
        %745 = vmatprep.subr.bf16.mxu0 0
        %746 = vmatpush1.bf16.msra.mxu0 %v630
        %747 = vmatprep.subr.bf16.mxu0 0
        %748 = vmatpush1.bf16.msra.mxu0 %v631
        %749 = vmatprep.subr.bf16.mxu0 0
        %750 = vmatpush1.bf16.msra.mxu0 %v632
        %751 = vmatprep.subr.bf16.mxu0 0
        %752 = vmatpush1.bf16.msra.mxu0 %v633
        %753 = vmatprep.subr.bf16.mxu0 0
        %754 = vmatpush1.bf16.msra.mxu0 %v634
        %755 = vmatprep.subr.bf16.mxu0 0
        %756 = vmatpush1.bf16.msra.mxu0 %v741
        %757 = vmatprep.subr.bf16.mxu0 0
        %758 = vmatpush1.bf16.msra.mxu0 0
        %759 = vmatprep.subr.bf16.mxu0 0
        %760 = vmatpush1.bf16.msra.mxu0 0
        %761 = vmatprep.subr.bf16.mxu0 0
        %762 = vmatpush1.bf16.msra.mxu0 0
        %763 = vmatprep.subr.bf16.mxu0 0
        %764 = vmatpush1.bf16.msra.mxu0 0
        %765 = vmatprep.subr.bf16.mxu0 0
        %766 = vmatpush1.bf16.msra.mxu0 0
        %767 = vmatprep.subr.bf16.mxu0 0
        %768 = vmatpush1.bf16.msra.mxu0 0
        %769 = vmatprep.subr.bf16.mxu0 0
        %770 = vmatpush1.bf16.msra.mxu0 0
        %771 = vmatprep.subr.bf16.mxu0 0
        %772 = vmatpush1.bf16.msra.mxu0 0
        %773 = vmatprep.subr.bf16.mxu0 0
        %774 = vmatpush1.bf16.msra.mxu0 0
        %775 = vmatprep.mubr.bf16.mxu0 0
        %776 = vmatmul.mubr.bf16.gmra.mrb[0].mxu0 %v644
        %v777 = vpop.f32.mrb[0].mxu0
        %v778 = vadd.f32 0.0, %v777
        %v779 = vpop.f32.mrb[0].mxu0
        %v780 = vpop.f32.mrb[0].mxu0
        %v781 = vadd.f32 0.0, %v780
        %v782 = vpop.f32.mrb[0].mxu0
        %783 = vmatprep.mubr.bf16.mxu0 0
        %784 = vmatmul.mubr.bf16.gmra.mrb[0].mxu0 %v647
        %v785 = vpop.f32.mrb[0].mxu0
        %v786 = vadd.f32 0.0, %v785
        %v787 = vpop.f32.mrb[0].mxu0
        %v788 = vpop.f32.mrb[0].mxu0
        %v789 = vadd.f32 0.0, %v788
        %v790 = vpop.f32.mrb[0].mxu0
        %791 = vmatprep.mubr.bf16.mxu0 0
        %792 = vmatmul.mubr.bf16.gmra.mrb[0].mxu0 %v650
        %v793 = vpop.f32.mrb[0].mxu0
        %v794 = vadd.f32 0.0, %v793
        %v795 = vpop.f32.mrb[0].mxu0
        %v796 = vpop.f32.mrb[0].mxu0
        %v797 = vadd.f32 0.0, %v796
        %v798 = vpop.f32.mrb[0].mxu0
        %799 = vmatprep.mubr.bf16.mxu0 0
        %800 = vmatmul.mubr.bf16.gmra.mrb[0].mxu0 %v653
        %v801 = vpop.f32.mrb[0].mxu0
        %v802 = vadd.f32 0.0, %v801
        %v803 = vpop.f32.mrb[0].mxu0
        %v804 = vpop.f32.mrb[0].mxu0
        %v805 = vadd.f32 0.0, %v804
        %v806 = vpop.f32.mrb[0].mxu0
        %807 = vmatprep.mubr.bf16.mxu0 0
        %808 = vmatmul.mubr.bf16.gmra.mrb[0].mxu0 %v656
        %v809 = vpop.f32.mrb[0].mxu0
        %v810 = vadd.f32 0.0, %v809
        %v811 = vpop.f32.mrb[0].mxu0
        %v812 = vpop.f32.mrb[0].mxu0
        %v813 = vadd.f32 0.0, %v812
        %v814 = vpop.f32.mrb[0].mxu0
        %815 = vmatprep.mubr.bf16.mxu0 0
        %816 = vmatmul.mubr.bf16.gmra.mrb[0].mxu0 %v659
        %v817 = vpop.f32.mrb[0].mxu0
        %v818 = vadd.f32 0.0, %v817
        %v819 = vpop.f32.mrb[0].mxu0
        %v820 = vpop.f32.mrb[0].mxu0
        %v821 = vadd.f32 0.0, %v820
        %v822 = vpop.f32.mrb[0].mxu0
        %823 = vmatprep.mubr.bf16.mxu0 0
        %824 = vmatmul.mubr.bf16.gmra.mrb[0].mxu0 %v662
        %v825 = vpop.f32.mrb[0].mxu0
        %v826 = vadd.f32 0.0, %v825
        %v827 = vpop.f32.mrb[0].mxu0
        %v828 = vpop.f32.mrb[0].mxu0
        %v829 = vadd.f32 0.0, %v828
        %v830 = vpop.f32.mrb[0].mxu0
        %831 = vmatprep.mubr.bf16.mxu0 0
        %832 = vmatmul.mubr.bf16.gmra.mrb[0].mxu0 %v665
        %v833 = vpop.f32.mrb[0].mxu0
        %v834 = vadd.f32 0.0, %v833
        %v835 = vpop.f32.mrb[0].mxu0
        %v836 = vpop.f32.mrb[0].mxu0
        %v837 = vadd.f32 0.0, %v836
        %v838 = vpop.f32.mrb[0].mxu0
        %839 = vmatprep.mubr.bf16.mxu0 0
        %840 = vmatmul.mubr.bf16.gmra.mrb[0].mxu0 %v668
        %v841 = vpop.f32.mrb[0].mxu0
        %v842 = vadd.f32 0.0, %v841
        %v843 = vpop.f32.mrb[0].mxu0
        %v844 = vpop.f32.mrb[0].mxu0
        %v845 = vadd.f32 0.0, %v844
        %v846 = vpop.f32.mrb[0].mxu0
        %847 = vmatprep.mubr.bf16.mxu0 0
        %848 = vmatmul.mubr.bf16.gmra.mrb[0].mxu0 %v671
        %v849 = vpop.f32.mrb[0].mxu0
        %v850 = vadd.f32 0.0, %v849
        %v851 = vpop.f32.mrb[0].mxu0
        %v852 = vpop.f32.mrb[0].mxu0
        %v853 = vadd.f32 0.0, %v852
        %v854 = vpop.f32.mrb[0].mxu0
        %855 = vmatprep.mubr.bf16.mxu0 0
        %856 = vmatmul.mubr.bf16.gmra.mrb[0].mxu0 %v674
        %v857 = vpop.f32.mrb[0].mxu0
        %v858 = vadd.f32 0.0, %v857
        %v859 = vpop.f32.mrb[0].mxu0
        %v860 = vpop.f32.mrb[0].mxu0
        %v861 = vadd.f32 0.0, %v860
        %v862 = vpop.f32.mrb[0].mxu0
        %863 = vmatprep.mubr.bf16.mxu0 0
        %864 = vmatmul.mubr.bf16.gmra.mrb[0].mxu0 %v677
        %v865 = vpop.f32.mrb[0].mxu0
        %v866 = vadd.f32 0.0, %v865
        %v867 = vpop.f32.mrb[0].mxu0
        %v868 = vpop.f32.mrb[0].mxu0
        %v869 = vadd.f32 0.0, %v868
        %v870 = vpop.f32.mrb[0].mxu0
        %871 = vmatprep.mubr.bf16.mxu0 0
        %872 = vmatmul.mubr.bf16.gmra.mrb[0].mxu0 %v680
        %v873 = vpop.f32.mrb[0].mxu0
        %v874 = vadd.f32 0.0, %v873
        %v875 = vpop.f32.mrb[0].mxu0
        %v876 = vpop.f32.mrb[0].mxu0
        %v877 = vadd.f32 0.0, %v876
        %v878 = vpop.f32.mrb[0].mxu0
        %879 = vmatprep.mubr.bf16.mxu0 0
        %880 = vmatmul.mubr.bf16.gmra.mrb[0].mxu0 %v683
        %v881 = vpop.f32.mrb[0].mxu0
        %v882 = vadd.f32 0.0, %v881
        %v883 = vpop.f32.mrb[0].mxu0
        %v884 = vpop.f32.mrb[0].mxu0
        %v885 = vadd.f32 0.0, %v884
        %v886 = vpop.f32.mrb[0].mxu0
        %887 = vmatprep.mubr.bf16.mxu0 0
        %888 = vmatmul.mubr.bf16.gmra.mrb[0].mxu0 %v686
        %v889 = vpop.f32.mrb[0].mxu0
        %v890 = vadd.f32 0.0, %v889
        %v891 = vpop.f32.mrb[0].mxu0
        %v892 = vpop.f32.mrb[0].mxu0
        %v893 = vadd.f32 0.0, %v892
        %v894 = vpop.f32.mrb[0].mxu0
        %895 = vmatprep.mubr.bf16.mxu0 0
        %896 = vmatmul.mubr.bf16.gmra.mrb[0].mxu0 %v689
        %v897 = vpop.f32.mrb[0].mxu0
        %v898 = vadd.f32 0.0, %v897
        %v899 = vpop.f32.mrb[0].mxu0
        %v900 = vpop.f32.mrb[0].mxu0
        %v901 = vadd.f32 0.0, %v900
        %v902 = vpop.f32.mrb[0].mxu0
        %903 = vmatprep.mubr.bf16.mxu0 0
        %904 = vmatmul.mubr.bf16.gmra.mrb[0].mxu0 %v692
        %v905 = vpop.f32.mrb[0].mxu0
        %v906 = vadd.f32 0.0, %v905
        %v907 = vpop.f32.mrb[0].mxu0
        %v908 = vpop.f32.mrb[0].mxu0
        %v909 = vadd.f32 0.0, %v908
        %v910 = vpop.f32.mrb[0].mxu0
        %911 = vmatprep.mubr.bf16.mxu0 0
        %912 = vmatmul.mubr.bf16.gmra.mrb[0].mxu0 %v695
        %v913 = vpop.f32.mrb[0].mxu0
        %v914 = vadd.f32 0.0, %v913
        %v915 = vpop.f32.mrb[0].mxu0
        %v916 = vpop.f32.mrb[0].mxu0
        %v917 = vadd.f32 0.0, %v916
        %v918 = vpop.f32.mrb[0].mxu0
        %919 = vmatprep.mubr.bf16.mxu0 0
        %920 = vmatmul.mubr.bf16.gmra.mrb[0].mxu0 %v698
        %v921 = vpop.f32.mrb[0].mxu0
        %v922 = vadd.f32 0.0, %v921
        %v923 = vpop.f32.mrb[0].mxu0
        %v924 = vpop.f32.mrb[0].mxu0
        %v925 = vadd.f32 0.0, %v924
        %v926 = vpop.f32.mrb[0].mxu0
        %927 = vmatprep.mubr.bf16.mxu0 0
        %928 = vmatmul.mubr.bf16.gmra.mrb[0].mxu0 %v701
        %v929 = vpop.f32.mrb[0].mxu0
        %v930 = vadd.f32 0.0, %v929
        %v931 = vpop.f32.mrb[0].mxu0
        %v932 = vpop.f32.mrb[0].mxu0
        %v933 = vadd.f32 0.0, %v932
        %v934 = vpop.f32.mrb[0].mxu0
        %935 = vmatprep.mubr.bf16.mxu0 0
        %936 = vmatmul.mubr.bf16.gmra.mrb[0].mxu0 %v704
        %v937 = vpop.f32.mrb[0].mxu0
        %v938 = vadd.f32 0.0, %v937
        %v939 = vpop.f32.mrb[0].mxu0
        %v940 = vpop.f32.mrb[0].mxu0
        %v941 = vadd.f32 0.0, %v940
        %v942 = vpop.f32.mrb[0].mxu0
        %943 = vmatprep.mubr.bf16.mxu0 0
        %944 = vmatmul.mubr.bf16.gmra.mrb[0].mxu0 %v707
        %v945 = vpop.f32.mrb[0].mxu0
        %v946 = vadd.f32 0.0, %v945
        %v947 = vpop.f32.mrb[0].mxu0
        %v948 = vpop.f32.mrb[0].mxu0
        %v949 = vadd.f32 0.0, %v948
        %v950 = vpop.f32.mrb[0].mxu0
        %951 = vmatprep.mubr.bf16.mxu0 0
        %952 = vmatmul.mubr.bf16.gmra.mrb[0].mxu0 %v710
        %v953 = vpop.f32.mrb[0].mxu0
        %v954 = vadd.f32 0.0, %v953
        %v955 = vpop.f32.mrb[0].mxu0
        %v956 = vpop.f32.mrb[0].mxu0
        %v957 = vadd.f32 0.0, %v956
        %v958 = vpop.f32.mrb[0].mxu0
        %959 = vmatprep.mubr.bf16.mxu0 0
        %960 = vmatmul.mubr.bf16.gmra.mrb[0].mxu0 %v713
        %v961 = vpop.f32.mrb[0].mxu0
        %v962 = vadd.f32 0.0, %v961
        %v963 = vpop.f32.mrb[0].mxu0
        %v964 = vpop.f32.mrb[0].mxu0
        %v965 = vadd.f32 0.0, %v964
        %v966 = vpop.f32.mrb[0].mxu0
        %967 = vmatprep.mubr.bf16.mxu0 0
        %968 = vmatmul.mubr.bf16.gmra.mrb[0].mxu0 %v716
        %v969 = vpop.f32.mrb[0].mxu0
        %v970 = vadd.f32 0.0, %v969
        %v971 = vpop.f32.mrb[0].mxu0
        %v972 = vpop.f32.mrb[0].mxu0
        %v973 = vadd.f32 0.0, %v972
        %v974 = vpop.f32.mrb[0].mxu0
        %975 = vmatprep.mubr.bf16.mxu0 0
        %976 = vmatmul.mubr.bf16.gmra.mrb[0].mxu0 %v719
        %v977 = vpop.f32.mrb[0].mxu0
        %v978 = vadd.f32 0.0, %v977
        %v979 = vpop.f32.mrb[0].mxu0
        %v980 = vpop.f32.mrb[0].mxu0
        %v981 = vadd.f32 0.0, %v980
        %v982 = vpop.f32.mrb[0].mxu0
        %983 = vmatprep.mubr.bf16.mxu0 0
        %984 = vmatmul.mubr.bf16.gmra.mrb[0].mxu0 %v722
        %v985 = vpop.f32.mrb[0].mxu0
        %v986 = vadd.f32 0.0, %v985
        %v987 = vpop.f32.mrb[0].mxu0
        %v988 = vpop.f32.mrb[0].mxu0
        %v989 = vadd.f32 0.0, %v988
        %v990 = vpop.f32.mrb[0].mxu0
        %991 = vmatprep.mubr.bf16.mxu0 0
        %992 = vmatmul.mubr.bf16.gmra.mrb[0].mxu0 %v725
        %v993 = vpop.f32.mrb[0].mxu0
        %v994 = vadd.f32 0.0, %v993
        %v995 = vpop.f32.mrb[0].mxu0
        %v996 = vpop.f32.mrb[0].mxu0
        %v997 = vadd.f32 0.0, %v996
        %v998 = vpop.f32.mrb[0].mxu0
        %999 = vmatprep.mubr.bf16.mxu0 0
        %1000 = vmatmul.mubr.bf16.gmra.mrb[0].mxu0 %v728
        %v1001 = vpop.f32.mrb[0].mxu0
        %v1002 = vadd.f32 0.0, %v1001
        %v1003 = vpop.f32.mrb[0].mxu0
        %v1004 = vpop.f32.mrb[0].mxu0
        %v1005 = vadd.f32 0.0, %v1004
        %v1006 = vpop.f32.mrb[0].mxu0
        %1007 = vmatprep.mubr.bf16.mxu0 0
        %1008 = vmatmul.mubr.bf16.gmra.mrb[0].mxu0 %v731
        %v1009 = vpop.f32.mrb[0].mxu0
        %v1010 = vadd.f32 0.0, %v1009
        %v1011 = vpop.f32.mrb[0].mxu0
        %v1012 = vpop.f32.mrb[0].mxu0
        %v1013 = vadd.f32 0.0, %v1012
        %v1014 = vpop.f32.mrb[0].mxu0
        %1015 = vmatprep.mubr.bf16.mxu0 0
        %1016 = vmatmul.mubr.bf16.gmra.mrb[0].mxu0 %v734
        %v1017 = vpop.f32.mrb[0].mxu0
        %v1018 = vadd.f32 0.0, %v1017
        %v1019 = vpop.f32.mrb[0].mxu0
        %v1020 = vpop.f32.mrb[0].mxu0
        %v1021 = vadd.f32 0.0, %v1020
        %v1022 = vpop.f32.mrb[0].mxu0
        %1023 = vmatprep.mubr.bf16.mxu0 0
        %1024 = vmatmul.mubr.bf16.gmra.mrb[0].mxu0 %v737
        %v1025 = vpop.f32.mrb[0].mxu0
        %v1026 = vadd.f32 0.0, %v1025
        %v1027 = vpop.f32.mrb[0].mxu0
        %v1028 = vpop.f32.mrb[0].mxu0
        %v1029 = vadd.f32 0.0, %v1028
        %v1030 = vpop.f32.mrb[0].mxu0
        %1031 = vdwg.mxu0
        %v1032 = vadd.f32 %v299, %v778
        %v1033 = vadd.f32 %v300, %v781
        %v1034 = vadd.f32 %v301, %v786
        %v1035 = vadd.f32 %v302, %v789
        %v1036 = vadd.f32 %v303, %v794
        %v1037 = vadd.f32 %v304, %v797
        %v1038 = vadd.f32 %v305, %v802
        %v1039 = vadd.f32 %v306, %v805
        %v1040 = vadd.f32 %v307, %v810
        %v1041 = vadd.f32 %v308, %v813
        %v1042 = vadd.f32 %v309, %v818
        %v1043 = vadd.f32 %v310, %v821
        %v1044 = vadd.f32 %v311, %v826
        %v1045 = vadd.f32 %v312, %v829
        %v1046 = vadd.f32 %v313, %v834
        %v1047 = vadd.f32 %v314, %v837
        %v1048 = vadd.f32 %v315, %v842
        %v1049 = vadd.f32 %v316, %v845
        %v1050 = vadd.f32 %v317, %v850
        %v1051 = vadd.f32 %v318, %v853
        %v1052 = vadd.f32 %v319, %v858
        %v1053 = vadd.f32 %v320, %v861
        %v1054 = vadd.f32 %v321, %v866
        %v1055 = vadd.f32 %v322, %v869
        %v1056 = vadd.f32 %v323, %v874
        %v1057 = vadd.f32 %v324, %v877
        %v1058 = vadd.f32 %v325, %v882
        %v1059 = vadd.f32 %v326, %v885
        %v1060 = vadd.f32 %v327, %v890
        %v1061 = vadd.f32 %v328, %v893
        %v1062 = vadd.f32 %v329, %v898
        %v1063 = vadd.f32 %v330, %v901
        %v1064 = vadd.f32 %v331, %v906
        %v1065 = vadd.f32 %v332, %v909
        %v1066 = vadd.f32 %v333, %v914
        %v1067 = vadd.f32 %v334, %v917
        %v1068 = vadd.f32 %v335, %v922
        %v1069 = vadd.f32 %v336, %v925
        %v1070 = vadd.f32 %v337, %v930
        %v1071 = vadd.f32 %v338, %v933
        %v1072 = vadd.f32 %v339, %v938
        %v1073 = vadd.f32 %v340, %v941
        %v1074 = vadd.f32 %v341, %v946
        %v1075 = vadd.f32 %v342, %v949
        %v1076 = vadd.f32 %v343, %v954
        %v1077 = vadd.f32 %v344, %v957
        %v1078 = vadd.f32 %v345, %v962
        %v1079 = vadd.f32 %v346, %v965
        %v1080 = vadd.f32 %v347, %v970
        %v1081 = vadd.f32 %v348, %v973
        %v1082 = vadd.f32 %v349, %v978
        %v1083 = vadd.f32 %v350, %v981
        %v1084 = vadd.f32 %v351, %v986
        %v1085 = vadd.f32 %v352, %v989
        %v1086 = vadd.f32 %v353, %v994
        %v1087 = vadd.f32 %v354, %v997
        %v1088 = vadd.f32 %v355, %v1002
        %v1089 = vadd.f32 %v356, %v1005
        %v1090 = vadd.f32 %v357, %v1010
        %v1091 = vadd.f32 %v358, %v1013
        %v1092 = vadd.f32 %v359, %v1018
        %v1093 = vadd.f32 %v360, %v1021
        %v1094 = vadd.f32 %v361, %v1026
        %v1095 = vadd.f32 %v362, %v1029
        %1096 = vst [vmem:[%s211] sm:$0xff] %v1032
        %1097 = vst [vmem:[%s211 + $0x8] sm:$0xff] %v1033
        %1098 = vst [vmem:[%s211 + $0x10] sm:$0xff] %v1034
        %1099 = vst [vmem:[%s211 + $0x18] sm:$0xff] %v1035
        %1100 = vst [vmem:[%s211 + $0x20] sm:$0xff] %v1036
        %1101 = vst [vmem:[%s211 + $0x28] sm:$0xff] %v1037
        %1102 = vst [vmem:[%s211 + $0x30] sm:$0xff] %v1038
        %1103 = vst [vmem:[%s211 + $0x38] sm:$0xff] %v1039
        %1104 = vst [vmem:[%s211 + $0x40] sm:$0xff] %v1040
        %1105 = vst [vmem:[%s211 + $0x48] sm:$0xff] %v1041
        %1106 = vst [vmem:[%s211 + $0x50] sm:$0xff] %v1042
        %1107 = vst [vmem:[%s211 + $0x58] sm:$0xff] %v1043
        %1108 = vst [vmem:[%s211 + $0x60] sm:$0xff] %v1044
        %1109 = vst [vmem:[%s211 + $0x68] sm:$0xff] %v1045
        %1110 = vst [vmem:[%s211 + $0x70] sm:$0xff] %v1046
        %1111 = vst [vmem:[%s211 + $0x78] sm:$0xff] %v1047
        %1112 = vst [vmem:[%s211 + $0x80] sm:$0xff] %v1048
        %1113 = vst [vmem:[%s211 + $0x88] sm:$0xff] %v1049
        %1114 = vst [vmem:[%s211 + $0x90] sm:$0xff] %v1050
        %1115 = vst [vmem:[%s211 + $0x98] sm:$0xff] %v1051
        %1116 = vst [vmem:[%s211 + $0xa0] sm:$0xff] %v1052
        %1117 = vst [vmem:[%s211 + $0xa8] sm:$0xff] %v1053
        %1118 = vst [vmem:[%s211 + $0xb0] sm:$0xff] %v1054
        %1119 = vst [vmem:[%s211 + $0xb8] sm:$0xff] %v1055
        %1120 = vst [vmem:[%s211 + $0xc0] sm:$0xff] %v1056
        %1121 = vst [vmem:[%s211 + $0xc8] sm:$0xff] %v1057
        %1122 = vst [vmem:[%s211 + $0xd0] sm:$0xff] %v1058
        %1123 = vst [vmem:[%s211 + $0xd8] sm:$0xff] %v1059
        %1124 = vst [vmem:[%s211 + $0xe0] sm:$0xff] %v1060
        %1125 = vst [vmem:[%s211 + $0xe8] sm:$0xff] %v1061
        %1126 = vst [vmem:[%s211 + $0xf0] sm:$0xff] %v1062
        %1127 = vst [vmem:[%s211 + $0xf8] sm:$0xff] %v1063
        %1128 = vst [vmem:[%s211 + $0x100] sm:$0xff] %v1064
        %1129 = vst [vmem:[%s211 + $0x108] sm:$0xff] %v1065
        %1130 = vst [vmem:[%s211 + $0x110] sm:$0xff] %v1066
        %1131 = vst [vmem:[%s211 + $0x118] sm:$0xff] %v1067
        %1132 = vst [vmem:[%s211 + $0x120] sm:$0xff] %v1068
        %1133 = vst [vmem:[%s211 + $0x128] sm:$0xff] %v1069
        %1134 = vst [vmem:[%s211 + $0x130] sm:$0xff] %v1070
        %1135 = vst [vmem:[%s211 + $0x138] sm:$0xff] %v1071
        %1136 = vst [vmem:[%s211 + $0x140] sm:$0xff] %v1072
        %1137 = vst [vmem:[%s211 + $0x148] sm:$0xff] %v1073
        %1138 = vst [vmem:[%s211 + $0x150] sm:$0xff] %v1074
        %1139 = vst [vmem:[%s211 + $0x158] sm:$0xff] %v1075
        %1140 = vst [vmem:[%s211 + $0x160] sm:$0xff] %v1076
        %1141 = vst [vmem:[%s211 + $0x168] sm:$0xff] %v1077
        %1142 = vst [vmem:[%s211 + $0x170] sm:$0xff] %v1078
        %1143 = vst [vmem:[%s211 + $0x178] sm:$0xff] %v1079
        %1144 = vst [vmem:[%s211 + $0x180] sm:$0xff] %v1080
        %1145 = vst [vmem:[%s211 + $0x188] sm:$0xff] %v1081
        %1146 = vst [vmem:[%s211 + $0x190] sm:$0xff] %v1082
        %1147 = vst [vmem:[%s211 + $0x198] sm:$0xff] %v1083
        %1148 = vst [vmem:[%s211 + $0x1a0] sm:$0xff] %v1084
        %1149 = vst [vmem:[%s211 + $0x1a8] sm:$0xff] %v1085
        %1150 = vst [vmem:[%s211 + $0x1b0] sm:$0xff] %v1086
        %1151 = vst [vmem:[%s211 + $0x1b8] sm:$0xff] %v1087
        %1152 = vst [vmem:[%s211 + $0x1c0] sm:$0xff] %v1088
        %1153 = vst [vmem:[%s211 + $0x1c8] sm:$0xff] %v1089
        %1154 = vst [vmem:[%s211 + $0x1d0] sm:$0xff] %v1090
        %1155 = vst [vmem:[%s211 + $0x1d8] sm:$0xff] %v1091
        %1156 = vst [vmem:[%s211 + $0x1e0] sm:$0xff] %v1092
        %1157 = vst [vmem:[%s211 + $0x1e8] sm:$0xff] %v1093
        %1158 = vst [vmem:[%s211 + $0x1f0] sm:$0xff] %v1094
        %1159 = vst [vmem:[%s211 + $0x1f8] sm:$0xff] %v1095
        // Predicated region
        $region37: #{tpu_custom_call.1} parent=27 // pred_check
          %p1160 = pneg %p231
        $region38: #{tpu_custom_call.1} parent=27 // pred_check_branch
          %1162 = sbr.rel (%p1160) target = $region40
        $region39: #{tpu_custom_call.1} parent=27 // pred_region
          %v1163 = vld [vmem:[%s211] sm:$0xff]
          %v1164 = vld [vmem:[%s211 + $0x8] sm:$0xff]
          %v1165 = vld [vmem:[%s211 + $0x10] sm:$0xff]
          %v1166 = vld [vmem:[%s211 + $0x18] sm:$0xff]
          %v1167 = vld [vmem:[%s211 + $0x20] sm:$0xff]
          %v1168 = vld [vmem:[%s211 + $0x28] sm:$0xff]
          %v1169 = vld [vmem:[%s211 + $0x30] sm:$0xff]
          %v1170 = vld [vmem:[%s211 + $0x38] sm:$0xff]
          %v1171 = vld [vmem:[%s211 + $0x40] sm:$0xff]
          %v1172 = vld [vmem:[%s211 + $0x48] sm:$0xff]
          %v1173 = vld [vmem:[%s211 + $0x50] sm:$0xff]
          %v1174 = vld [vmem:[%s211 + $0x58] sm:$0xff]
          %v1175 = vld [vmem:[%s211 + $0x60] sm:$0xff]
          %v1176 = vld [vmem:[%s211 + $0x68] sm:$0xff]
          %v1177 = vld [vmem:[%s211 + $0x70] sm:$0xff]
          %v1178 = vld [vmem:[%s211 + $0x78] sm:$0xff]
          %v1179 = vld [vmem:[%s211 + $0x80] sm:$0xff]
          %v1180 = vld [vmem:[%s211 + $0x88] sm:$0xff]
          %v1181 = vld [vmem:[%s211 + $0x90] sm:$0xff]
          %v1182 = vld [vmem:[%s211 + $0x98] sm:$0xff]
          %v1183 = vld [vmem:[%s211 + $0xa0] sm:$0xff]
          %v1184 = vld [vmem:[%s211 + $0xa8] sm:$0xff]
          %v1185 = vld [vmem:[%s211 + $0xb0] sm:$0xff]
          %v1186 = vld [vmem:[%s211 + $0xb8] sm:$0xff]
          %v1187 = vld [vmem:[%s211 + $0xc0] sm:$0xff]
          %v1188 = vld [vmem:[%s211 + $0xc8] sm:$0xff]
          %v1189 = vld [vmem:[%s211 + $0xd0] sm:$0xff]
          %v1190 = vld [vmem:[%s211 + $0xd8] sm:$0xff]
          %v1191 = vld [vmem:[%s211 + $0xe0] sm:$0xff]
          %v1192 = vld [vmem:[%s211 + $0xe8] sm:$0xff]
          %v1193 = vld [vmem:[%s211 + $0xf0] sm:$0xff]
          %v1194 = vld [vmem:[%s211 + $0xf8] sm:$0xff]
          %v1195 = vld [vmem:[%s211 + $0x100] sm:$0xff]
          %v1196 = vld [vmem:[%s211 + $0x108] sm:$0xff]
          %v1197 = vld [vmem:[%s211 + $0x110] sm:$0xff]
          %v1198 = vld [vmem:[%s211 + $0x118] sm:$0xff]
          %v1199 = vld [vmem:[%s211 + $0x120] sm:$0xff]
          %v1200 = vld [vmem:[%s211 + $0x128] sm:$0xff]
          %v1201 = vld [vmem:[%s211 + $0x130] sm:$0xff]
          %v1202 = vld [vmem:[%s211 + $0x138] sm:$0xff]
          %v1203 = vld [vmem:[%s211 + $0x140] sm:$0xff]
          %v1204 = vld [vmem:[%s211 + $0x148] sm:$0xff]
          %v1205 = vld [vmem:[%s211 + $0x150] sm:$0xff]
          %v1206 = vld [vmem:[%s211 + $0x158] sm:$0xff]
          %v1207 = vld [vmem:[%s211 + $0x160] sm:$0xff]
          %v1208 = vld [vmem:[%s211 + $0x168] sm:$0xff]
          %v1209 = vld [vmem:[%s211 + $0x170] sm:$0xff]
          %v1210 = vld [vmem:[%s211 + $0x178] sm:$0xff]
          %v1211 = vld [vmem:[%s211 + $0x180] sm:$0xff]
          %v1212 = vld [vmem:[%s211 + $0x188] sm:$0xff]
          %v1213 = vld [vmem:[%s211 + $0x190] sm:$0xff]
          %v1214 = vld [vmem:[%s211 + $0x198] sm:$0xff]
          %v1215 = vld [vmem:[%s211 + $0x1a0] sm:$0xff]
          %v1216 = vld [vmem:[%s211 + $0x1a8] sm:$0xff]
          %v1217 = vld [vmem:[%s211 + $0x1b0] sm:$0xff]
          %v1218 = vld [vmem:[%s211 + $0x1b8] sm:$0xff]
          %v1219 = vld [vmem:[%s211 + $0x1c0] sm:$0xff]
          %v1220 = vld [vmem:[%s211 + $0x1c8] sm:$0xff]
          %v1221 = vld [vmem:[%s211 + $0x1d0] sm:$0xff]
          %v1222 = vld [vmem:[%s211 + $0x1d8] sm:$0xff]
          %v1223 = vld [vmem:[%s211 + $0x1e0] sm:$0xff]
          %v1224 = vld [vmem:[%s211 + $0x1e8] sm:$0xff]
          %v1225 = vld [vmem:[%s211 + $0x1f0] sm:$0xff]
          %v1226 = vld [vmem:[%s211 + $0x1f8] sm:$0xff]
          %v1227 = vadd.f32 %v1163, %v1164
          %v1228 = vadd.f32 %v1227, %v1165
          %v1229 = vadd.f32 %v1228, %v1166
          %v1230 = vadd.f32 %v1229, %v1167
          %v1231 = vadd.f32 %v1230, %v1168
          %v1232 = vadd.f32 %v1231, %v1169
          %v1233 = vadd.f32 %v1232, %v1170
          %v1234 = vadd.f32 %v1233, %v1171
          %v1235 = vadd.f32 %v1234, %v1172
          %v1236 = vadd.f32 %v1235, %v1173
          %v1237 = vadd.f32 %v1236, %v1174
          %v1238 = vadd.f32 %v1237, %v1175
          %v1239 = vadd.f32 %v1238, %v1176
          %v1240 = vadd.f32 %v1239, %v1177
          %v1241 = vadd.f32 %v1240, %v1178
          %v1242 = vadd.f32 %v1241, %v1179
          %v1243 = vadd.f32 %v1242, %v1180
          %v1244 = vadd.f32 %v1243, %v1181
          %v1245 = vadd.f32 %v1244, %v1182
          %v1246 = vadd.f32 %v1245, %v1183
          %v1247 = vadd.f32 %v1246, %v1184
          %v1248 = vadd.f32 %v1247, %v1185
          %v1249 = vadd.f32 %v1248, %v1186
          %v1250 = vadd.f32 %v1249, %v1187
          %v1251 = vadd.f32 %v1250, %v1188
          %v1252 = vadd.f32 %v1251, %v1189
          %v1253 = vadd.f32 %v1252, %v1190
          %v1254 = vadd.f32 %v1253, %v1191
          %v1255 = vadd.f32 %v1254, %v1192
          %v1256 = vadd.f32 %v1255, %v1193
          %v1257 = vadd.f32 %v1256, %v1194
          %v1258 = vadd.f32 %v1257, %v1195
          %v1259 = vadd.f32 %v1258, %v1196
          %v1260 = vadd.f32 %v1259, %v1197
          %v1261 = vadd.f32 %v1260, %v1198
          %v1262 = vadd.f32 %v1261, %v1199
          %v1263 = vadd.f32 %v1262, %v1200
          %v1264 = vadd.f32 %v1263, %v1201
          %v1265 = vadd.f32 %v1264, %v1202
          %v1266 = vadd.f32 %v1265, %v1203
          %v1267 = vadd.f32 %v1266, %v1204
          %v1268 = vadd.f32 %v1267, %v1205
          %v1269 = vadd.f32 %v1268, %v1206
          %v1270 = vadd.f32 %v1269, %v1207
          %v1271 = vadd.f32 %v1270, %v1208
          %v1272 = vadd.f32 %v1271, %v1209
          %v1273 = vadd.f32 %v1272, %v1210
          %v1274 = vadd.f32 %v1273, %v1211
          %v1275 = vadd.f32 %v1274, %v1212
          %v1276 = vadd.f32 %v1275, %v1213
          %v1277 = vadd.f32 %v1276, %v1214
          %v1278 = vadd.f32 %v1277, %v1215
          %v1279 = vadd.f32 %v1278, %v1216
          %v1280 = vadd.f32 %v1279, %v1217
          %v1281 = vadd.f32 %v1280, %v1218
          %v1282 = vadd.f32 %v1281, %v1219
          %v1283 = vadd.f32 %v1282, %v1220
          %v1284 = vadd.f32 %v1283, %v1221
          %v1285 = vadd.f32 %v1284, %v1222
          %v1286 = vadd.f32 %v1285, %v1223
          %v1287 = vadd.f32 %v1286, %v1224
          %v1288 = vadd.f32 %v1287, %v1225
          %v1289 = vadd.f32 %v1288, %v1226
          %v1290 = vrot.slane %v1289, 4
          %v1291 = vadd.f32 %v1289, %v1290
          %v1292 = vrot.slane %v1291, 2
          %v1293 = vadd.f32 %v1291, %v1292
          %v1294 = vrot.slane %v1293, 1
          %v1295 = vadd.f32 %v1293, %v1294
          %v1296 = vmul.f32 %v1163, %v1163
          %v1297 = vmul.f32 %v1164, %v1164
          %v1298 = vmul.f32 %v1165, %v1165
          %v1299 = vmul.f32 %v1166, %v1166
          %v1300 = vmul.f32 %v1167, %v1167
          %v1301 = vmul.f32 %v1168, %v1168
          %v1302 = vmul.f32 %v1169, %v1169
          %v1303 = vmul.f32 %v1170, %v1170
          %v1304 = vmul.f32 %v1171, %v1171
          %v1305 = vmul.f32 %v1172, %v1172
          %v1306 = vmul.f32 %v1173, %v1173
          %v1307 = vmul.f32 %v1174, %v1174
          %v1308 = vmul.f32 %v1175, %v1175
          %v1309 = vmul.f32 %v1176, %v1176
          %v1310 = vmul.f32 %v1177, %v1177
          %v1311 = vmul.f32 %v1178, %v1178
          %v1312 = vmul.f32 %v1179, %v1179
          %v1313 = vmul.f32 %v1180, %v1180
          %v1314 = vmul.f32 %v1181, %v1181
          %v1315 = vmul.f32 %v1182, %v1182
          %v1316 = vmul.f32 %v1183, %v1183
          %v1317 = vmul.f32 %v1184, %v1184
          %v1318 = vmul.f32 %v1185, %v1185
          %v1319 = vmul.f32 %v1186, %v1186
          %v1320 = vmul.f32 %v1187, %v1187
          %v1321 = vmul.f32 %v1188, %v1188
          %v1322 = vmul.f32 %v1189, %v1189
          %v1323 = vmul.f32 %v1190, %v1190
          %v1324 = vmul.f32 %v1191, %v1191
          %v1325 = vmul.f32 %v1192, %v1192
          %v1326 = vmul.f32 %v1193, %v1193
          %v1327 = vmul.f32 %v1194, %v1194
          %v1328 = vmul.f32 %v1195, %v1195
          %v1329 = vmul.f32 %v1196, %v1196
          %v1330 = vmul.f32 %v1197, %v1197
          %v1331 = vmul.f32 %v1198, %v1198
          %v1332 = vmul.f32 %v1199, %v1199
          %v1333 = vmul.f32 %v1200, %v1200
          %v1334 = vmul.f32 %v1201, %v1201
          %v1335 = vmul.f32 %v1202, %v1202
          %v1336 = vmul.f32 %v1203, %v1203
          %v1337 = vmul.f32 %v1204, %v1204
          %v1338 = vmul.f32 %v1205, %v1205
          %v1339 = vmul.f32 %v1206, %v1206
          %v1340 = vmul.f32 %v1207, %v1207
          %v1341 = vmul.f32 %v1208, %v1208
          %v1342 = vmul.f32 %v1209, %v1209
          %v1343 = vmul.f32 %v1210, %v1210
          %v1344 = vmul.f32 %v1211, %v1211
          %v1345 = vmul.f32 %v1212, %v1212
          %v1346 = vmul.f32 %v1213, %v1213
          %v1347 = vmul.f32 %v1214, %v1214
          %v1348 = vmul.f32 %v1215, %v1215
          %v1349 = vmul.f32 %v1216, %v1216
          %v1350 = vmul.f32 %v1217, %v1217
          %v1351 = vmul.f32 %v1218, %v1218
          %v1352 = vmul.f32 %v1219, %v1219
          %v1353 = vmul.f32 %v1220, %v1220
          %v1354 = vmul.f32 %v1221, %v1221
          %v1355 = vmul.f32 %v1222, %v1222
          %v1356 = vmul.f32 %v1223, %v1223
          %v1357 = vmul.f32 %v1224, %v1224
          %v1358 = vmul.f32 %v1225, %v1225
          %v1359 = vmul.f32 %v1226, %v1226
          %v1360 = vadd.f32 %v1296, %v1297
          %v1361 = vadd.f32 %v1360, %v1298
          %v1362 = vadd.f32 %v1361, %v1299
          %v1363 = vadd.f32 %v1362, %v1300
          %v1364 = vadd.f32 %v1363, %v1301
          %v1365 = vadd.f32 %v1364, %v1302
          %v1366 = vadd.f32 %v1365, %v1303
          %v1367 = vadd.f32 %v1366, %v1304
          %v1368 = vadd.f32 %v1367, %v1305
          %v1369 = vadd.f32 %v1368, %v1306
          %v1370 = vadd.f32 %v1369, %v1307
          %v1371 = vadd.f32 %v1370, %v1308
          %v1372 = vadd.f32 %v1371, %v1309
          %v1373 = vadd.f32 %v1372, %v1310
          %v1374 = vadd.f32 %v1373, %v1311
          %v1375 = vadd.f32 %v1374, %v1312
          %v1376 = vadd.f32 %v1375, %v1313
          %v1377 = vadd.f32 %v1376, %v1314
          %v1378 = vadd.f32 %v1377, %v1315
          %v1379 = vadd.f32 %v1378, %v1316
          %v1380 = vadd.f32 %v1379, %v1317
          %v1381 = vadd.f32 %v1380, %v1318
          %v1382 = vadd.f32 %v1381, %v1319
          %v1383 = vadd.f32 %v1382, %v1320
          %v1384 = vadd.f32 %v1383, %v1321
          %v1385 = vadd.f32 %v1384, %v1322
          %v1386 = vadd.f32 %v1385, %v1323
          %v1387 = vadd.f32 %v1386, %v1324
          %v1388 = vadd.f32 %v1387, %v1325
          %v1389 = vadd.f32 %v1388, %v1326
          %v1390 = vadd.f32 %v1389, %v1327
          %v1391 = vadd.f32 %v1390, %v1328
          %v1392 = vadd.f32 %v1391, %v1329
          %v1393 = vadd.f32 %v1392, %v1330
          %v1394 = vadd.f32 %v1393, %v1331
          %v1395 = vadd.f32 %v1394, %v1332
          %v1396 = vadd.f32 %v1395, %v1333
          %v1397 = vadd.f32 %v1396, %v1334
          %v1398 = vadd.f32 %v1397, %v1335
          %v1399 = vadd.f32 %v1398, %v1336
          %v1400 = vadd.f32 %v1399, %v1337
          %v1401 = vadd.f32 %v1400, %v1338
          %v1402 = vadd.f32 %v1401, %v1339
          %v1403 = vadd.f32 %v1402, %v1340
          %v1404 = vadd.f32 %v1403, %v1341
          %v1405 = vadd.f32 %v1404, %v1342
          %v1406 = vadd.f32 %v1405, %v1343
          %v1407 = vadd.f32 %v1406, %v1344
          %v1408 = vadd.f32 %v1407, %v1345
          %v1409 = vadd.f32 %v1408, %v1346
          %v1410 = vadd.f32 %v1409, %v1347
          %v1411 = vadd.f32 %v1410, %v1348
          %v1412 = vadd.f32 %v1411, %v1349
          %v1413 = vadd.f32 %v1412, %v1350
          %v1414 = vadd.f32 %v1413, %v1351
          %v1415 = vadd.f32 %v1414, %v1352
          %v1416 = vadd.f32 %v1415, %v1353
          %v1417 = vadd.f32 %v1416, %v1354
          %v1418 = vadd.f32 %v1417, %v1355
          %v1419 = vadd.f32 %v1418, %v1356
          %v1420 = vadd.f32 %v1419, %v1357
          %v1421 = vadd.f32 %v1420, %v1358
          %v1422 = vadd.f32 %v1421, %v1359
          %v1423 = vrot.slane %v1422, 4
          %v1424 = vadd.f32 %v1422, %v1423
          %v1425 = vrot.slane %v1424, 2
          %v1426 = vadd.f32 %v1424, %v1425
          %v1427 = vrot.slane %v1426, 1
          %v1428 = vadd.f32 %v1426, %v1427
          %vm1429 = vcmask 1040384
          %v1430 = vsel %vm1429, %v1295, %v1428
          %vm1431 = vcmask 1041408
          %v1432 = vsel %vm1431, %v1430, 0.0
          %1433 = vst [vmem:[%s218] sm:$0xff] %v1432
        $region40: #{tpu_custom_call.1} parent=27 // pred_fallthru
          _
        %s1434 = sand.u32 %s96, 1
        %s1435 = scalar_lea.sflag [#allocation4], %s1434
        %s1436 = sand.u32 %s96, 1
        %s1437 = smul.addr %s1436, 512
        %s1438 = scalar_lea.vmem [#allocation5], %s1437
        %s1439 = sand.u32 %s122, 1
        %s1440 = scalar_lea.sflag [#allocation7], %s1439
        %s1441 = sand.u32 %s122, 1
        %s1442 = smul.addr %s1441, 8
        %s1443 = scalar_lea.vmem [#allocation6], %s1442
        // Predicated region
        $region41: #{tpu_custom_call.1} parent=27 // pred_check
          %p1444 = pneg %p106
        $region42: #{tpu_custom_call.1} parent=27 // pred_check_branch
          %1446 = sbr.rel (%p1444) target = $region44
        $region43: #{tpu_custom_call.1} parent=27 // pred_region
          %s1447 = smul.u32 64, %s26
          %s1449 = ssub.s32 8192, 8192
          %1450 = vsyncadd %s1435, %s1449
          %s1451 = smul.addr %s1447, 128
          %s1452 = scalar_lea.hbm %s2, %s1451
          %s1453 = sshll.u32 %s1438, 4
          %s1454 = int_to_ptr.vmem [resolvable:$true] %s1453
          %1459 = dma.vmem_to_hbm [thread:$0]  %s1454, 8192, %s1452, %s1435, 128, 128, 8
        $region44: #{tpu_custom_call.1} parent=27 // pred_fallthru
          _
        // Predicated region
        $region45: #{tpu_custom_call.1} parent=27 // pred_check
          %p1460 = pneg %p132
        $region46: #{tpu_custom_call.1} parent=27 // pred_check_branch
          %1462 = sbr.rel (%p1460) target = $region48
        $region47: #{tpu_custom_call.1} parent=27 // pred_region
          %s1464 = ssub.s32 128, 128
          %1465 = vsyncadd %s1440, %s1464
          %s1466 = smul.addr %s26, 128
          %s1467 = scalar_lea.hbm %s3, %s1466
          %s1469 = sshll.u32 %s1443, 4
          %s1470 = int_to_ptr.vmem [resolvable:$true] %s1469
          %1472 = dma.vmem_to_hbm [thread:$0]  %s1470, 128, %s1467, %s1440
        $region48: #{tpu_custom_call.1} parent=27 // pred_fallthru
          _
      $region28: #{tpu_custom_call.1} parent=5 // pred_fallthru
        _
      %p1473 = scmp.le.s32.totalorder 2, %s17
      // Predicated region
      $region49: #{tpu_custom_call.1} parent=5 // pred_check
        %p1474 = pneg %p1473
      $region50: #{tpu_custom_call.1} parent=5 // pred_check_branch
        %1476 = sbr.rel (%p1474) target = $region52
      $region51: #{tpu_custom_call.1} parent=5 // pred_region
        %s1477 = ssub.s32 %s17, 2
        // Predicated region
        $region53: #{tpu_custom_call.1} parent=51 // pred_check
          %p1478 = pneg %p112
        $region54: #{tpu_custom_call.1} parent=51 // pred_check_branch
          %1480 = sbr.rel (%p1478) target = $region56
        $region55: #{tpu_custom_call.1} parent=51 // pred_region
          %s1481 = sand.u32 %s97, 1
          %s1482 = scalar_lea.sflag [#allocation4], %s1481
          %s1483 = sand.u32 %s97, 1
          %s1484 = smul.addr %s1483, 512
          %s1485 = scalar_lea.vmem [#allocation5], %s1484
          %1486 = dma.done %s1482, 8192
        $region56: #{tpu_custom_call.1} parent=51 // pred_fallthru
          _
        // Predicated region
        $region57: #{tpu_custom_call.1} parent=51 // pred_check
          %p1487 = pneg %p138
        $region58: #{tpu_custom_call.1} parent=51 // pred_check_branch
          %1489 = sbr.rel (%p1487) target = $region60
        $region59: #{tpu_custom_call.1} parent=51 // pred_region
          %s1490 = sand.u32 %s123, 1
          %s1491 = scalar_lea.sflag [#allocation7], %s1490
          %s1492 = sand.u32 %s123, 1
          %s1493 = smul.addr %s1492, 8
          %s1494 = scalar_lea.vmem [#allocation6], %s1493
          %1495 = dma.done %s1491, 128
        $region60: #{tpu_custom_call.1} parent=51 // pred_fallthru
          _
      $region52: #{tpu_custom_call.1} parent=5 // pred_fallthru
        _
    $region6: #{tpu_custom_call.1} parent=1 // loop_footer
      %s21 = sadd.s32 1, %s17
    $region7: #{tpu_custom_call.1} parent=1 // loop_footer_branch
      %16 = sbr.rel target = $region3
    $region8: #{tpu_custom_call.1} parent=1 // loop_exit
      _
    %1496 = vsyncpa [#allocation3], 1
    %s1497 = scalar_lea.sflag [#allocation3], 1
    %1498 = vsyncpa %s1497, 1
    %1499 = vsyncpa [#allocation4], 1
    %s1500 = scalar_lea.sflag [#allocation4], 1
    %1501 = vsyncpa %s1500, 1
    %1502 = vsyncpa [#allocation7], 1
    %s1503 = scalar_lea.sflag [#allocation7], 1
    %1504 = vsyncpa %s1503, 1

</llo_original>
